<compile_context>
chip_gen: v5e
topology: v5e:2x2
jax: 0.10.0
libtpu: 0.0.40
codegen_flags: <defaults>
</compile_context>

<pallas_src>
import functools
import math

import jax
import jax.numpy as jnp
from jax.experimental import pallas as pl
from jax.experimental.pallas import tpu as pltpu

DENSITIES_BUFFER = 1e-8
_HIGHEST = jax.lax.Precision.HIGHEST


# ------------------------------ sizing helpers ------------------------------

def _vmem_limit_bytes():
    """Generation-aware scoped-VMEM budget (v5e/v6e: 128 MiB, v7x: 64 MiB)."""
    cap = 128 * 1024 * 1024
    try:
        cap = int(getattr(pltpu.get_tpu_info(), "vmem_capacity_bytes", cap))
    except Exception:
        pass
    return int(min(cap * 3 // 4, 100 * 1024 * 1024))


def _pick_tile(dim, candidates):
    for t in candidates:
        if dim % t == 0:
            return t
    return dim  # full extent: always legal


def _tq_candidates(vmem_limit):
    if vmem_limit < 80 * 1024 * 1024:        # v7x-class part (64 MiB VMEM/core)
        return (128, 64, 32, 16)
    return (256, 128, 64, 32, 16)


def _pad_cols(a, mult):
    pad = (-a.shape[-1]) % mult
    if pad == 0:
        return a
    return jnp.pad(a, [(0, 0)] * (a.ndim - 1) + [(0, pad)])


# ----------------------------- tiled matmul --------------------------------

def _matmul_kernel(x_ref, w_ref, o_ref, acc_ref):
    @pl.when(pl.program_id(2) == 0)
    def _():
        acc_ref[...] = jnp.zeros_like(acc_ref)

    acc_ref[...] += jnp.dot(x_ref[...].astype(jnp.bfloat16),
                            w_ref[...].astype(jnp.bfloat16),
                            preferred_element_type=jnp.float32)

    @pl.when(pl.program_id(2) == pl.num_programs(2) - 1)
    def _():
        o_ref[...] = acc_ref[...].astype(o_ref.dtype)


def _matmul_bias_kernel(x_ref, w_ref, b_ref, o_ref, acc_ref):
    @pl.when(pl.program_id(2) == 0)
    def _():
        acc_ref[...] = jnp.zeros_like(acc_ref)

    acc_ref[...] += jnp.dot(x_ref[...].astype(jnp.bfloat16),
                            w_ref[...].astype(jnp.bfloat16),
                            preferred_element_type=jnp.float32)

    @pl.when(pl.program_id(2) == pl.num_programs(2) - 1)
    def _():
        o_ref[...] = (acc_ref[...] + b_ref[...]).astype(o_ref.dtype)


def tiled_matmul(x, w, bias=None, *, out_dtype=jnp.float32, vmem_limit=None):
    """x @ w (+ bias): (M, N, K) grid, bf16 MXU operands, f32 VMEM accumulator.

    Callers pad the weight's N dimension to a multiple of 128 so output stores
    are lane-dense (no masked vst), and slice the padding off afterwards.
    """
    if vmem_limit is None:
        vmem_limit = _vmem_limit_bytes()
    M, K = x.shape
    K2, N = w.shape
    assert K == K2
    tm = _pick_tile(M, (512, 256, 128, 64, 32, 16))
    tn = _pick_tile(N, (512, 256, 128))
    tk = _pick_tile(K, (512, 256, 128))
    grid = (M // tm, N // tn, K // tk)

    common = dict(
        out_shape=jax.ShapeDtypeStruct((M, N), out_dtype),
        grid=grid,
        out_specs=pl.BlockSpec((tm, tn), lambda i, j, kk: (i, j)),
        scratch_shapes=[pltpu.VMEM((tm, tn), jnp.float32)],
        compiler_params=pltpu.CompilerParams(
            dimension_semantics=("parallel", "parallel", "arbitrary"),
            vmem_limit_bytes=vmem_limit),
    )
    x_spec = pl.BlockSpec((tm, tk), lambda i, j, kk: (i, kk))
    w_spec = pl.BlockSpec((tk, tn), lambda i, j, kk: (kk, j))

    if bias is None:
        return pl.pallas_call(_matmul_kernel,
                              in_specs=[x_spec, w_spec], **common)(x, w)
    b2 = bias.reshape(1, N)
    b_spec = pl.BlockSpec((1, tn), lambda i, j, kk: (0, j))
    return pl.pallas_call(_matmul_bias_kernel,
                          in_specs=[x_spec, w_spec, b_spec], **common)(x, w, b2)


# ----------------------- gathered sparse-attention kernel -------------------

def _sparse_attn_kernel(idx_ref, pw_ref, q_ref, kv_ref, o_ref, *,
                        n_heads, head_size):
    H, D = n_heads, head_size
    tq = q_ref.shape[0]
    C = kv_ref.shape[0]
    P = idx_ref.shape[-1]

    # Lane iota over the resident context axis (hoisted out of the head loop).
    lane = jax.lax.broadcasted_iota(jnp.int32, (tq, P, C), 2)

    q_all = q_ref[...]       # (tq, H*D)  bf16; 1/head_size folded into weights
    kv_all = kv_ref[...]     # (C, H*2*D) bf16; per-head [K_h | V_h] slabs

    outs = []
    for h in range(H):       # static unrolled loop over heads
        idx_h = idx_ref[h]                                      # (tq, P) int32
        # One-hot gather matrix in bf16 (exact for 0/1) -> a SINGLE fused MXU
        # matmul gathers both K and V rows for this head.
        onehot = (lane == idx_h[:, :, None]).astype(jnp.bfloat16)
        onehot = onehot.reshape(tq * P, C)
        # TODO(synk): per-head lane sub-slices (2D < 128) may relayout; a
        # per-head grid axis would avoid it for very large head counts.
        kv_h = kv_all[:, h * 2 * D:(h + 1) * 2 * D]             # (C, 2D)
        gkv = jnp.dot(onehot, kv_h,
                      preferred_element_type=jnp.float32).reshape(tq, P, 2 * D)
        gk, gv = gkv[..., :D], gkv[..., D:]                     # (tq, P, D) f32

        q_h = q_all[:, h * D:(h + 1) * D].astype(jnp.float32)   # (tq, D)
        dots = jnp.sum(gk * q_h[:, None, :], axis=-1)           # (tq, P)
        logits = pw_ref[h] * dots
        logits = logits - jnp.max(logits, axis=-1, keepdims=True)
        e = jnp.exp(logits)
        nw = e * pl.reciprocal(jnp.sum(e, axis=-1, keepdims=True), approx=True)
        outs.append(jnp.sum(gv * nw[:, :, None], axis=1))       # (tq, D)

    # Single lane-dense store in the (B, C, H*D) layout the unify matmul eats.
    o_ref[...] = jnp.concatenate(outs, axis=-1).astype(o_ref.dtype)


def sparse_attention_heads(idx, point_w, q, kv, *, n_heads, head_size,
                           vmem_limit):
    B, C, HD = q.shape
    H, D = n_heads, head_size
    P = idx.shape[-1]
    tq = _pick_tile(C, _tq_candidates(vmem_limit))
    grid = (B, C // tq)

    # Resident K/V assumes the full (C, 2*H*D) bf16 slab fits in VMEM.
    kv_bytes = 2 * C * 2 * HD * 2        # double-buffered bf16 K|V slab
    assert kv_bytes < vmem_limit, (
        f"resident K/V ({kv_bytes} B) exceeds VMEM budget ({vmem_limit} B); "
        "tile the context axis for long contexts")  # TODO(synk): C-tiled path

    kernel = functools.partial(_sparse_attn_kernel, n_heads=H, head_size=D)
    hp_spec = pl.BlockSpec((None, H, tq, P), lambda b, qi: (b, 0, qi, 0))
    q_spec = pl.BlockSpec((None, tq, HD), lambda b, qi: (b, qi, 0))
    kv_spec = pl.BlockSpec((None, C, 2 * HD), lambda b, qi: (b, 0, 0))  # resident

    return pl.pallas_call(
        kernel,
        out_shape=jax.ShapeDtypeStruct((B, C, HD), jnp.bfloat16),
        grid=grid,
        in_specs=[hp_spec, hp_spec, q_spec, kv_spec],
        out_specs=pl.BlockSpec((None, tq, HD), lambda b, qi: (b, qi, 0)),
        compiler_params=pltpu.CompilerParams(
            dimension_semantics=("parallel", "arbitrary"),
            vmem_limit_bytes=vmem_limit),
    )(idx, point_w, q, kv)


# ---------------------- point indices & mixture weights ---------------------

def _points_and_weights(means, sigmas, values, context):
    """Eval-mode sparse.ngenerate + sparse.densities + util.nduplicates."""
    C = context
    P = 2 * means.shape[-1]
    fl = jnp.floor(means)
    idx_f = jnp.concatenate([jnp.clip(fl, 0.0, C - 1.0),
                             jnp.clip(fl + 1.0, 0.0, C - 1.0)], axis=-1)
    idx = idx_f.astype(jnp.int32)                               # (..., P)
    diff = (idx_f[..., :, None] - means[..., None, :]) / sigmas[..., None, :]
    dens = jnp.exp(-0.5 * diff * diff)                          # (..., P, k)
    eq = idx[..., :, None] == idx[..., None, :]                 # (..., P, P)
    earlier = jnp.tril(jnp.ones((P, P), dtype=bool), -1)
    dup = jnp.any(eq & earlier, axis=-1)                        # (..., P)
    dens = jnp.where(dup[..., None], 0.0, dens)
    dens = dens / (dens.sum(axis=-2, keepdims=True) + DENSITIES_BUFFER)
    weights = (values[..., None, :] * dens).sum(-1)             # (..., P)
    return idx, weights


def _hyper_points(x2d, w_hyper, B, C, H, k):
    """Hyper projection + point/weight generation.  Kept entirely in f32
    (HIGHEST): floor(means) flips discretely under bf16 rounding.
    TODO(synk): `hyper` is abstract in torch; simple linear parameterisation."""
    hyp = jnp.dot(x2d, w_hyper, precision=_HIGHEST).reshape(B, C, H, k, 3)
    hyp = jnp.transpose(hyp, (0, 2, 1, 3, 4))                   # (B,H,C,k,3)
    means = jax.nn.sigmoid(hyp[..., 0]) * (C - 1)               # rank == 1
    sigmas = jax.nn.softplus(hyp[..., 1]) + 0.1
    values = hyp[..., 2]
    return _points_and_weights(means, sigmas, values, C)        # (B,H,C,P) x2


# ------------------------------ full forward --------------------------------

def init_params(key, emb, n_heads, head_size, k):
    hd = n_heads * head_size
    keys = jax.random.split(key, 6)

    def lin(kk, fan_in, fan_out):
        bound = 1.0 / math.sqrt(fan_in)
        return jax.random.uniform(kk, (fan_in, fan_out), jnp.float32,
                                  -bound, bound)

    return dict(
        w_keys=lin(keys[0], emb, hd),
        w_queries=lin(keys[1], emb, hd),
        w_values=lin(keys[2], emb, hd),
        w_unify=lin(keys[3], hd, emb),
        b_unify=jax.random.uniform(keys[4], (emb,), jnp.float32,
                                   -1.0 / math.sqrt(hd), 1.0 / math.sqrt(hd)),
        w_hyper=lin(keys[5], emb, n_heads * k * 3),
    )


def sparse_attention_forward(params, x, attention_mask=None, *,
                             n_heads, head_size, k):
    # attention_mask is accepted for signature parity with the torch module but
    # (as in the torch forward) never used.
    del attention_mask
    B, C, E = x.shape
    H, D = n_heads, head_size
    HD = H * D
    vmem_limit = _vmem_limit_bytes()
    x2d = x.reshape(B * C, E)

    # Hyper path (f32) -> per-point indices and mixture weights, (B,H,C,P).
    idx, point_w = _hyper_points(x2d, params['w_hyper'], B, C, H, k)

    # Fused Q|KV projection: both 1/sqrt(head_size) scales folded into the
    # query weights; K/V columns interleaved per head so the attention kernel
    # reads one contiguous (C, 2D) slab per head.  bf16 operands/output,
    # f32 MXU accumulation, N padded to a lane-dense multiple of 128.
    w_q = params['w_queries'] * (1.0 / D)
    w_kv = jnp.concatenate(
        [params['w_keys'].reshape(E, H, D), params['w_values'].reshape(E, H, D)],
        axis=-1).reshape(E, 2 * HD)
    w_fused = jnp.concatenate([w_q, w_kv], axis=1).astype(jnp.bfloat16)
    proj = tiled_matmul(x2d, _pad_cols(w_fused, 128),
                        out_dtype=jnp.bfloat16, vmem_limit=vmem_limit)
    Q = proj[:, :HD].reshape(B, C, HD)
    KV = proj[:, HD:3 * HD].reshape(B, C, 2 * HD)

    heads = sparse_attention_heads(idx, point_w, Q, KV, n_heads=H, head_size=D,
                                   vmem_limit=vmem_limit)        # (B,C,HD) bf16

    w_u = _pad_cols(params['w_unify'].astype(jnp.bfloat16), 128)
    b_u = jnp.pad(params['b_unify'], (0, (-E) % 128))
    out = tiled_matmul(heads.reshape(B * C, HD), w_u, bias=b_u,
                       out_dtype=jnp.float32, vmem_limit=vmem_limit)[:, :E]
    return out.reshape(B, C, E)


# ----------------------------- pure-JAX reference ----------------------------

def reference_forward(params, x, *, n_heads, head_size, k):
    B, C, E = x.shape
    H, D = n_heads, head_size
    x2d = x.reshape(B * C, E)

    idx, weights = _hyper_points(x2d, params['w_hyper'], B, C, H, k)

    Kp = jnp.dot(x2d, params['w_keys'], precision=_HIGHEST).reshape(B, C, H, D)
    Qp = jnp.dot(x2d, params['w_queries'], precision=_HIGHEST).reshape(B, C, H, D)
    Vp = jnp.dot(x2d, params['w_values'], precision=_HIGHEST).reshape(B, C, H, D)
    Kp = Kp.transpose(0, 2, 1, 3) / D ** 0.5
    Qp = Qp.transpose(0, 2, 1, 3) / D ** 0.5
    Vp = Vp.transpose(0, 2, 1, 3)

    def gather_bh(mat, ind):            # mat (C, D), ind (C, P)
        return mat[ind]
    gk = jax.vmap(jax.vmap(gather_bh))(Kp, idx)
    gv = jax.vmap(jax.vmap(gather_bh))(Vp, idx)
    dots = jnp.einsum('bhcd,bhcpd->bhcp', Qp, gk, precision=_HIGHEST)
    nw = jax.nn.softmax(weights * dots, axis=-1)
    head = jnp.einsum('bhcpd,bhcp->bhcd', gv, nw, precision=_HIGHEST)
    united = head.transpose(0, 2, 1, 3).reshape(B * C, H * D)
    out = jnp.dot(united, params['w_unify'],
                  precision=_HIGHEST) + params['b_unify']
    return out.reshape(B, C, E)


if __name__ == "__main__":
    emb, n_heads, head_size, k = 32, 2, 16, 4
    batch, context = 2, 16

    key = jax.random.PRNGKey(0)
    kp, kx = jax.random.split(key)
    params = init_params(kp, emb, n_heads, head_size, k)
    x = jax.random.normal(kx, (batch, context, emb), jnp.float32)
    attention_mask = jnp.ones((batch, context), jnp.float32)  # unused (parity)

    fwd = jax.jit(functools.partial(sparse_attention_forward,
                                    n_heads=n_heads, head_size=head_size, k=k))
    out = jax.block_until_ready(fwd(params, x, attention_mask))

    assert out.shape == (batch, context, emb)
    assert bool(jnp.all(jnp.isfinite(out)))
    ref = reference_forward(params, x, n_heads=n_heads, head_size=head_size, k=k)
    err = float(jnp.max(jnp.abs(out - ref)))
    assert err < 5e-2, f"max abs diff {err}"
    print("KERNEL_OK")
</pallas_src>

<mosaic_0001>
module attributes {stable_mosaic.version = 11 : i64} {
  func.func @_sparse_attn_kernel(%arg0: i32, %arg1: i32, %arg2: memref<1x2x16x8xi32, #tpu.memory_space<vmem>>, %arg3: memref<1x2x16x8xf32, #tpu.memory_space<vmem>>, %arg4: memref<1x16x32xbf16, #tpu.memory_space<vmem>>, %arg5: memref<1x16x64xbf16, #tpu.memory_space<vmem>>, %arg6: memref<1x16x32xbf16, #tpu.memory_space<vmem>>) attributes {dimension_semantics = [#tpu.dimension_semantics<parallel>, #tpu.dimension_semantics<arbitrary>], iteration_bounds = array<i64: 2, 1>, scalar_prefetch = 0 : i64, scratch_operands = 0 : i64, tpu.core_type = #tpu.core_type<tc>, window_params = [{transform_indices = @transform_0, window_bounds = array<i64: 1, 2, 16, 8>}, {transform_indices = @transform_1, window_bounds = array<i64: 1, 2, 16, 8>}, {transform_indices = @transform_2, window_bounds = array<i64: 1, 16, 32>}, {transform_indices = @transform_3, window_bounds = array<i64: 1, 16, 64>}, {transform_indices = @transform_4, window_bounds = array<i64: 1, 16, 32>}]} {
    %0 = tpu.iota {dimensions = array<i32: 2>} : vector<16x8x16xi32>
    %c0 = arith.constant 0 : index
    %c0_0 = arith.constant 0 : index
    %c0_1 = arith.constant 0 : index
    %1 = vector.load %arg4[%c0, %c0_0, %c0_1] : memref<1x16x32xbf16, #tpu.memory_space<vmem>>, vector<1x16x32xbf16>
    %2 = vector.shape_cast %1 : vector<1x16x32xbf16> to vector<16x32xbf16>
    %c0_2 = arith.constant 0 : index
    %c0_3 = arith.constant 0 : index
    %c0_4 = arith.constant 0 : index
    %3 = vector.load %arg5[%c0_2, %c0_3, %c0_4] : memref<1x16x64xbf16, #tpu.memory_space<vmem>>, vector<1x16x64xbf16>
    %4 = vector.shape_cast %3 : vector<1x16x64xbf16> to vector<16x64xbf16>
    %c0_5 = arith.constant 0 : index
    %c0_6 = arith.constant 0 : index
    %c0_7 = arith.constant 0 : index
    %c0_8 = arith.constant 0 : index
    %5 = vector.load %arg2[%c0_5, %c0_6, %c0_7, %c0_8] : memref<1x2x16x8xi32, #tpu.memory_space<vmem>>, vector<1x1x16x8xi32>
    %6 = vector.shape_cast %5 : vector<1x1x16x8xi32> to vector<16x8xi32>
    %7 = vector.shape_cast %6 : vector<16x8xi32> to vector<16x8x1xi32>
    %8 = vector.broadcast %7 : vector<16x8x1xi32> to vector<16x8x16xi32>
    %9 = arith.cmpi eq, %0, %8 : vector<16x8x16xi32>
    %10 = arith.extui %9 : vector<16x8x16xi1> to vector<16x8x16xi32>
    %11 = arith.sitofp %10 : vector<16x8x16xi32> to vector<16x8x16xf32>
    %12 = arith.truncf %11 : vector<16x8x16xf32> to vector<16x8x16xbf16>
    %13 = vector.shape_cast %12 : vector<16x8x16xbf16> to vector<128x16xbf16>
    %14 = vector.extract_strided_slice %4 {offsets = [0, 0], sizes = [16, 32], strides = [1, 1]} : vector<16x64xbf16> to vector<16x32xbf16>
    %cst = arith.constant dense<0.000000e+00> : vector<128x32xf32>
    %15 = tpu.matmul %13, %14, %cst {dimension_numbers = #tpu.dot_dimension_numbers<[1], [0], [0], [1], [0, 0, 1, 1], [], []>} : vector<128x16xbf16>, vector<16x32xbf16>, vector<128x32xf32> -> vector<128x32xf32>
    %16 = vector.shape_cast %15 : vector<128x32xf32> to vector<16x8x32xf32>
    %17 = vector.extract_strided_slice %16 {offsets = [0, 0, 0], sizes = [16, 8, 16], strides = [1, 1, 1]} : vector<16x8x32xf32> to vector<16x8x16xf32>
    %18 = vector.extract_strided_slice %16 {offsets = [0, 0, 16], sizes = [16, 8, 16], strides = [1, 1, 1]} : vector<16x8x32xf32> to vector<16x8x16xf32>
    %19 = vector.extract_strided_slice %2 {offsets = [0, 0], sizes = [16, 16], strides = [1, 1]} : vector<16x32xbf16> to vector<16x16xbf16>
    %20 = arith.extf %19 : vector<16x16xbf16> to vector<16x16xf32>
    %21 = vector.shape_cast %20 : vector<16x16xf32> to vector<16x1x16xf32>
    %22 = vector.broadcast %21 : vector<16x1x16xf32> to vector<16x8x16xf32>
    %23 = arith.mulf %17, %22 : vector<16x8x16xf32>
    %cst_9 = arith.constant dense<0.000000e+00> : vector<16x8xf32>
    %24 = vector.multi_reduction <add>, %23, %cst_9 [2] : vector<16x8x16xf32> to vector<16x8xf32>
    %c0_10 = arith.constant 0 : index
    %c0_11 = arith.constant 0 : index
    %c0_12 = arith.constant 0 : index
    %c0_13 = arith.constant 0 : index
    %25 = vector.load %arg3[%c0_10, %c0_11, %c0_12, %c0_13] : memref<1x2x16x8xf32, #tpu.memory_space<vmem>>, vector<1x1x16x8xf32>
    %26 = vector.shape_cast %25 : vector<1x1x16x8xf32> to vector<16x8xf32>
    %27 = arith.mulf %26, %24 : vector<16x8xf32>
    %cst_14 = arith.constant dense<0xFF800000> : vector<16xf32>
    %28 = vector.multi_reduction <maximumf>, %27, %cst_14 [1] : vector<16x8xf32> to vector<16xf32>
    %29 = vector.shape_cast %28 : vector<16xf32> to vector<16x1xf32>
    %30 = vector.broadcast %29 : vector<16x1xf32> to vector<16x8xf32>
    %31 = arith.subf %27, %30 : vector<16x8xf32>
    %32 = math.exp %31 : vector<16x8xf32>
    %cst_15 = arith.constant dense<0.000000e+00> : vector<16xf32>
    %33 = vector.multi_reduction <add>, %32, %cst_15 [1] : vector<16x8xf32> to vector<16xf32>
    %34 = vector.shape_cast %33 : vector<16xf32> to vector<16x1xf32>
    %35 = tpu.reciprocal %34 {approx = true} : vector<16x1xf32> -> vector<16x1xf32>
    %36 = vector.broadcast %35 : vector<16x1xf32> to vector<16x8xf32>
    %37 = arith.mulf %32, %36 : vector<16x8xf32>
    %38 = vector.shape_cast %37 : vector<16x8xf32> to vector<16x8x1xf32>
    %39 = vector.broadcast %38 : vector<16x8x1xf32> to vector<16x8x16xf32>
    %40 = arith.mulf %18, %39 : vector<16x8x16xf32>
    %cst_16 = arith.constant dense<0.000000e+00> : vector<16x16xf32>
    %41 = vector.multi_reduction <add>, %40, %cst_16 [1] : vector<16x8x16xf32> to vector<16x16xf32>
    %c0_17 = arith.constant 0 : index
    %c1 = arith.constant 1 : index
    %c0_18 = arith.constant 0 : index
    %c0_19 = arith.constant 0 : index
    %42 = vector.load %arg2[%c0_17, %c1, %c0_18, %c0_19] : memref<1x2x16x8xi32, #tpu.memory_space<vmem>>, vector<1x1x16x8xi32>
    %43 = vector.shape_cast %42 : vector<1x1x16x8xi32> to vector<16x8xi32>
    %44 = vector.shape_cast %43 : vector<16x8xi32> to vector<16x8x1xi32>
    %45 = vector.broadcast %44 : vector<16x8x1xi32> to vector<16x8x16xi32>
    %46 = arith.cmpi eq, %0, %45 : vector<16x8x16xi32>
    %47 = arith.extui %46 : vector<16x8x16xi1> to vector<16x8x16xi32>
    %48 = arith.sitofp %47 : vector<16x8x16xi32> to vector<16x8x16xf32>
    %49 = arith.truncf %48 : vector<16x8x16xf32> to vector<16x8x16xbf16>
    %50 = vector.shape_cast %49 : vector<16x8x16xbf16> to vector<128x16xbf16>
    %51 = vector.extract_strided_slice %4 {offsets = [0, 32], sizes = [16, 32], strides = [1, 1]} : vector<16x64xbf16> to vector<16x32xbf16>
    %cst_20 = arith.constant dense<0.000000e+00> : vector<128x32xf32>
    %52 = tpu.matmul %50, %51, %cst_20 {dimension_numbers = #tpu.dot_dimension_numbers<[1], [0], [0], [1], [0, 0, 1, 1], [], []>} : vector<128x16xbf16>, vector<16x32xbf16>, vector<128x32xf32> -> vector<128x32xf32>
    %53 = vector.shape_cast %52 : vector<128x32xf32> to vector<16x8x32xf32>
    %54 = vector.extract_strided_slice %53 {offsets = [0, 0, 0], sizes = [16, 8, 16], strides = [1, 1, 1]} : vector<16x8x32xf32> to vector<16x8x16xf32>
    %55 = vector.extract_strided_slice %53 {offsets = [0, 0, 16], sizes = [16, 8, 16], strides = [1, 1, 1]} : vector<16x8x32xf32> to vector<16x8x16xf32>
    %56 = vector.extract_strided_slice %2 {offsets = [0, 16], sizes = [16, 16], strides = [1, 1]} : vector<16x32xbf16> to vector<16x16xbf16>
    %57 = arith.extf %56 : vector<16x16xbf16> to vector<16x16xf32>
    %58 = vector.shape_cast %57 : vector<16x16xf32> to vector<16x1x16xf32>
    %59 = vector.broadcast %58 : vector<16x1x16xf32> to vector<16x8x16xf32>
    %60 = arith.mulf %54, %59 : vector<16x8x16xf32>
    %cst_21 = arith.constant dense<0.000000e+00> : vector<16x8xf32>
    %61 = vector.multi_reduction <add>, %60, %cst_21 [2] : vector<16x8x16xf32> to vector<16x8xf32>
    %c0_22 = arith.constant 0 : index
    %c1_23 = arith.constant 1 : index
    %c0_24 = arith.constant 0 : index
    %c0_25 = arith.constant 0 : index
    %62 = vector.load %arg3[%c0_22, %c1_23, %c0_24, %c0_25] : memref<1x2x16x8xf32, #tpu.memory_space<vmem>>, vector<1x1x16x8xf32>
    %63 = vector.shape_cast %62 : vector<1x1x16x8xf32> to vector<16x8xf32>
    %64 = arith.mulf %63, %61 : vector<16x8xf32>
    %cst_26 = arith.constant dense<0xFF800000> : vector<16xf32>
    %65 = vector.multi_reduction <maximumf>, %64, %cst_26 [1] : vector<16x8xf32> to vector<16xf32>
    %66 = vector.shape_cast %65 : vector<16xf32> to vector<16x1xf32>
    %67 = vector.broadcast %66 : vector<16x1xf32> to vector<16x8xf32>
    %68 = arith.subf %64, %67 : vector<16x8xf32>
    %69 = math.exp %68 : vector<16x8xf32>
    %cst_27 = arith.constant dense<0.000000e+00> : vector<16xf32>
    %70 = vector.multi_reduction <add>, %69, %cst_27 [1] : vector<16x8xf32> to vector<16xf32>
    %71 = vector.shape_cast %70 : vector<16xf32> to vector<16x1xf32>
    %72 = tpu.reciprocal %71 {approx = true} : vector<16x1xf32> -> vector<16x1xf32>
    %73 = vector.broadcast %72 : vector<16x1xf32> to vector<16x8xf32>
    %74 = arith.mulf %69, %73 : vector<16x8xf32>
    %75 = vector.shape_cast %74 : vector<16x8xf32> to vector<16x8x1xf32>
    %76 = vector.broadcast %75 : vector<16x8x1xf32> to vector<16x8x16xf32>
    %77 = arith.mulf %55, %76 : vector<16x8x16xf32>
    %cst_28 = arith.constant dense<0.000000e+00> : vector<16x16xf32>
    %78 = vector.multi_reduction <add>, %77, %cst_28 [1] : vector<16x8x16xf32> to vector<16x16xf32>
    %79 = tpu.concatenate %41, %78 in 1 : vector<16x16xf32>, vector<16x16xf32> -> vector<16x32xf32>
    %80 = arith.truncf %79 : vector<16x32xf32> to vector<16x32xbf16>
    %c0_29 = arith.constant 0 : index
    %c0_30 = arith.constant 0 : index
    %c0_31 = arith.constant 0 : index
    %81 = vector.load %arg6[%c0_29, %c0_30, %c0_31] : memref<1x16x32xbf16, #tpu.memory_space<vmem>>, vector<1x16x32xbf16>
    %82 = vector.shape_cast %81 : vector<1x16x32xbf16> to vector<16x32xbf16>
    %83 = vector.shape_cast %80 : vector<16x32xbf16> to vector<1x16x32xbf16>
    tpu.vector_store %arg6[%c0_29, %c0_30, %c0_31], %83 {strides = array<i32>} : memref<1x16x32xbf16, #tpu.memory_space<vmem>>, vector<1x16x32xbf16>,
    return
  }
  func.func @transform_0(%arg0: i32, %arg1: i32) -> (i32, i32, i32, i32) {
    %c0_i32 = arith.constant 0 : i32
    %c0_i32_0 = arith.constant 0 : i32
    %c0_i32_1 = arith.constant 0 : i32
    return %arg0, %c0_i32, %arg1, %c0_i32_0 : i32, i32, i32, i32
  }
  func.func @transform_1(%arg0: i32, %arg1: i32) -> (i32, i32, i32, i32) {
    %c0_i32 = arith.constant 0 : i32
    %c0_i32_0 = arith.constant 0 : i32
    %c0_i32_1 = arith.constant 0 : i32
    return %arg0, %c0_i32, %arg1, %c0_i32_0 : i32, i32, i32, i32
  }
  func.func @transform_2(%arg0: i32, %arg1: i32) -> (i32, i32, i32) {
    %c0_i32 = arith.constant 0 : i32
    %c0_i32_0 = arith.constant 0 : i32
    return %arg0, %arg1, %c0_i32 : i32, i32, i32
  }
  func.func @transform_3(%arg0: i32, %arg1: i32) -> (i32, i32, i32) {
    %c0_i32 = arith.constant 0 : i32
    %c0_i32_0 = arith.constant 0 : i32
    %c0_i32_1 = arith.constant 0 : i32
    return %arg0, %c0_i32, %c0_i32_0 : i32, i32, i32
  }
  func.func @transform_4(%arg0: i32, %arg1: i32) -> (i32, i32, i32) {
    %c0_i32 = arith.constant 0 : i32
    %c0_i32_0 = arith.constant 0 : i32
    return %arg0, %arg1, %c0_i32 : i32, i32, i32
  }
}

module attributes {stable_mosaic.version = 11 : i64} {
  func.func @_matmul_kernel(%arg0: i32, %arg1: i32, %arg2: i32, %arg3: memref<32x32xf32, #tpu.memory_space<vmem>>, %arg4: memref<32x128xbf16, #tpu.memory_space<vmem>>, %arg5: memref<32x128xbf16, #tpu.memory_space<vmem>>, %arg6: memref<32x128xf32, #tpu.memory_space<vmem>>) attributes {dimension_semantics = [#tpu.dimension_semantics<parallel>, #tpu.dimension_semantics<parallel>, #tpu.dimension_semantics<arbitrary>], iteration_bounds = array<i64: 1, 1, 1>, scalar_prefetch = 0 : i64, scratch_operands = 1 : i64, tpu.core_type = #tpu.core_type<tc>, window_params = [{transform_indices = @transform_0, window_bounds = array<i64: 32, 32>}, {transform_indices = @transform_1, window_bounds = array<i64: 32, 128>}, {transform_indices = @transform_2, window_bounds = array<i64: 32, 128>}]} {
    %c0_i32 = arith.constant 0 : i32
    %0 = arith.cmpi eq, %arg2, %c0_i32 : i32
    %1 = arith.extui %0 : i1 to i32
    %c0_i32_0 = arith.constant 0 : i32
    %2 = arith.cmpi ne, %1, %c0_i32_0 : i32
    scf.if %2 {
      %cst_10 = arith.constant 0.000000e+00 : f32
      %13 = vector.broadcast %cst_10 : f32 to vector<32x128xf32>
      %c0_11 = arith.constant 0 : index
      %c0_12 = arith.constant 0 : index
      %14 = vector.load %arg6[%c0_11, %c0_12] : memref<32x128xf32, #tpu.memory_space<vmem>>, vector<32x128xf32>
      tpu.vector_store %arg6[%c0_11, %c0_12], %13 {strides = array<i32>} : memref<32x128xf32, #tpu.memory_space<vmem>>, vector<32x128xf32>,
    } else {
    }
    %c0 = arith.constant 0 : index
    %c0_1 = arith.constant 0 : index
    %3 = vector.load %arg6[%c0, %c0_1] : memref<32x128xf32, #tpu.memory_space<vmem>>, vector<32x128xf32>
    %c0_2 = arith.constant 0 : index
    %c0_3 = arith.constant 0 : index
    %4 = vector.load %arg3[%c0_2, %c0_3] : memref<32x32xf32, #tpu.memory_space<vmem>>, vector<32x32xf32>
    %5 = arith.truncf %4 : vector<32x32xf32> to vector<32x32xbf16>
    %c0_4 = arith.constant 0 : index
    %c0_5 = arith.constant 0 : index
    %6 = vector.load %arg4[%c0_4, %c0_5] : memref<32x128xbf16, #tpu.memory_space<vmem>>, vector<32x128xbf16>
    %cst = arith.constant dense<0.000000e+00> : vector<32x128xf32>
    %7 = tpu.matmul %5, %6, %cst {dimension_numbers = #tpu.dot_dimension_numbers<[1], [0], [0], [1], [0, 0, 1, 1], [], []>} : vector<32x32xbf16>, vector<32x128xbf16>, vector<32x128xf32> -> vector<32x128xf32>
    %8 = arith.addf %3, %7 : vector<32x128xf32>
    %c0_6 = arith.constant 0 : index
    %c0_7 = arith.constant 0 : index
    %9 = vector.load %arg6[%c0_6, %c0_7] : memref<32x128xf32, #tpu.memory_space<vmem>>, vector<32x128xf32>
    tpu.vector_store %arg6[%c0_6, %c0_7], %8 {strides = array<i32>} : memref<32x128xf32, #tpu.memory_space<vmem>>, vector<32x128xf32>,
    %c0_i32_8 = arith.constant 0 : i32
    %10 = arith.cmpi eq, %arg2, %c0_i32_8 : i32
    %11 = arith.extui %10 : i1 to i32
    %c0_i32_9 = arith.constant 0 : i32
    %12 = arith.cmpi ne, %11, %c0_i32_9 : i32
    scf.if %12 {
      %c0_10 = arith.constant 0 : index
      %c0_11 = arith.constant 0 : index
      %13 = vector.load %arg6[%c0_10, %c0_11] : memref<32x128xf32, #tpu.memory_space<vmem>>, vector<32x128xf32>
      %14 = arith.truncf %13 : vector<32x128xf32> to vector<32x128xbf16>
      %c0_12 = arith.constant 0 : index
      %c0_13 = arith.constant 0 : index
      %15 = vector.load %arg5[%c0_12, %c0_13] : memref<32x128xbf16, #tpu.memory_space<vmem>>, vector<32x128xbf16>
      tpu.vector_store %arg5[%c0_12, %c0_13], %14 {strides = array<i32>} : memref<32x128xbf16, #tpu.memory_space<vmem>>, vector<32x128xbf16>,
    } else {
    }
    return
  }
  func.func @transform_0(%arg0: i32, %arg1: i32, %arg2: i32) -> (i32, i32) {
    %c0_i32 = arith.constant 0 : i32
    return %arg0, %arg2 : i32, i32
  }
  func.func @transform_1(%arg0: i32, %arg1: i32, %arg2: i32) -> (i32, i32) {
    %c0_i32 = arith.constant 0 : i32
    return %arg2, %arg1 : i32, i32
  }
  func.func @transform_2(%arg0: i32, %arg1: i32, %arg2: i32) -> (i32, i32) {
    %c0_i32 = arith.constant 0 : i32
    return %arg0, %arg1 : i32, i32
  }
}

module attributes {stable_mosaic.version = 11 : i64} {
  func.func @_matmul_bias_kernel(%arg0: i32, %arg1: i32, %arg2: i32, %arg3: memref<32x32xbf16, #tpu.memory_space<vmem>>, %arg4: memref<32x128xbf16, #tpu.memory_space<vmem>>, %arg5: memref<1x128xf32, #tpu.memory_space<vmem>>, %arg6: memref<32x128xf32, #tpu.memory_space<vmem>>, %arg7: memref<32x128xf32, #tpu.memory_space<vmem>>) attributes {dimension_semantics = [#tpu.dimension_semantics<parallel>, #tpu.dimension_semantics<parallel>, #tpu.dimension_semantics<arbitrary>], iteration_bounds = array<i64: 1, 1, 1>, scalar_prefetch = 0 : i64, scratch_operands = 1 : i64, tpu.core_type = #tpu.core_type<tc>, window_params = [{transform_indices = @transform_0, window_bounds = array<i64: 32, 32>}, {transform_indices = @transform_1, window_bounds = array<i64: 32, 128>}, {transform_indices = @transform_2, window_bounds = array<i64: 1, 128>}, {transform_indices = @transform_3, window_bounds = array<i64: 32, 128>}]} {
    %c0_i32 = arith.constant 0 : i32
    %0 = arith.cmpi eq, %arg2, %c0_i32 : i32
    %1 = arith.extui %0 : i1 to i32
    %c0_i32_0 = arith.constant 0 : i32
    %2 = arith.cmpi ne, %1, %c0_i32_0 : i32
    scf.if %2 {
      %cst_10 = arith.constant 0.000000e+00 : f32
      %12 = vector.broadcast %cst_10 : f32 to vector<32x128xf32>
      %c0_11 = arith.constant 0 : index
      %c0_12 = arith.constant 0 : index
      %13 = vector.load %arg7[%c0_11, %c0_12] : memref<32x128xf32, #tpu.memory_space<vmem>>, vector<32x128xf32>
      tpu.vector_store %arg7[%c0_11, %c0_12], %12 {strides = array<i32>} : memref<32x128xf32, #tpu.memory_space<vmem>>, vector<32x128xf32>,
    } else {
    }
    %c0 = arith.constant 0 : index
    %c0_1 = arith.constant 0 : index
    %3 = vector.load %arg7[%c0, %c0_1] : memref<32x128xf32, #tpu.memory_space<vmem>>, vector<32x128xf32>
    %c0_2 = arith.constant 0 : index
    %c0_3 = arith.constant 0 : index
    %4 = vector.load %arg3[%c0_2, %c0_3] : memref<32x32xbf16, #tpu.memory_space<vmem>>, vector<32x32xbf16>
    %c0_4 = arith.constant 0 : index
    %c0_5 = arith.constant 0 : index
    %5 = vector.load %arg4[%c0_4, %c0_5] : memref<32x128xbf16, #tpu.memory_space<vmem>>, vector<32x128xbf16>
    %cst = arith.constant dense<0.000000e+00> : vector<32x128xf32>
    %6 = tpu.matmul %4, %5, %cst {dimension_numbers = #tpu.dot_dimension_numbers<[1], [0], [0], [1], [0, 0, 1, 1], [], []>} : vector<32x32xbf16>, vector<32x128xbf16>, vector<32x128xf32> -> vector<32x128xf32>
    %7 = arith.addf %3, %6 : vector<32x128xf32>
    %c0_6 = arith.constant 0 : index
    %c0_7 = arith.constant 0 : index
    %8 = vector.load %arg7[%c0_6, %c0_7] : memref<32x128xf32, #tpu.memory_space<vmem>>, vector<32x128xf32>
    tpu.vector_store %arg7[%c0_6, %c0_7], %7 {strides = array<i32>} : memref<32x128xf32, #tpu.memory_space<vmem>>, vector<32x128xf32>,
    %c0_i32_8 = arith.constant 0 : i32
    %9 = arith.cmpi eq, %arg2, %c0_i32_8 : i32
    %10 = arith.extui %9 : i1 to i32
    %c0_i32_9 = arith.constant 0 : i32
    %11 = arith.cmpi ne, %10, %c0_i32_9 : i32
    scf.if %11 {
      %c0_10 = arith.constant 0 : index
      %c0_11 = arith.constant 0 : index
      %12 = vector.load %arg7[%c0_10, %c0_11] : memref<32x128xf32, #tpu.memory_space<vmem>>, vector<32x128xf32>
      %c0_12 = arith.constant 0 : index
      %c0_13 = arith.constant 0 : index
      %13 = vector.load %arg5[%c0_12, %c0_13] : memref<1x128xf32, #tpu.memory_space<vmem>>, vector<1x128xf32>
      %14 = vector.broadcast %13 : vector<1x128xf32> to vector<32x128xf32>
      %15 = arith.addf %12, %14 : vector<32x128xf32>
      %c0_14 = arith.constant 0 : index
      %c0_15 = arith.constant 0 : index
      %16 = vector.load %arg6[%c0_14, %c0_15] : memref<32x128xf32, #tpu.memory_space<vmem>>, vector<32x128xf32>
      tpu.vector_store %arg6[%c0_14, %c0_15], %15 {strides = array<i32>} : memref<32x128xf32, #tpu.memory_space<vmem>>, vector<32x128xf32>,
    } else {
    }
    return
  }
  func.func @transform_0(%arg0: i32, %arg1: i32, %arg2: i32) -> (i32, i32) {
    %c0_i32 = arith.constant 0 : i32
    return %arg0, %arg2 : i32, i32
  }
  func.func @transform_1(%arg0: i32, %arg1: i32, %arg2: i32) -> (i32, i32) {
    %c0_i32 = arith.constant 0 : i32
    return %arg2, %arg1 : i32, i32
  }
  func.func @transform_2(%arg0: i32, %arg1: i32, %arg2: i32) -> (i32, i32) {
    %c0_i32 = arith.constant 0 : i32
    %c0_i32_0 = arith.constant 0 : i32
    return %c0_i32, %arg1 : i32, i32
  }
  func.func @transform_3(%arg0: i32, %arg1: i32, %arg2: i32) -> (i32, i32) {
    %c0_i32 = arith.constant 0 : i32
    return %arg0, %arg1 : i32, i32
  }
}

</mosaic_0001>

<llo_original>
// kernel: sparse_attention_forward.3
$region0: #{sparse_attention_forward.3}
  #allocation0 [shape = 'u32[]', space=smem, size = 0x4, offset = 0x4, fixed_abs, tag = 'smem constant byte address 0x4 - core index']
  #allocation1 [shape = 'u32[72,128]{1,0:T(1,128)}', space=vmem, size = 0x9000, scoped, tag = 'internal scratch']
  #allocation2 [shape = 'f32[32,128]{1,0:T(8,128)}', space=vmem, size = 0x4000, scoped, tag = 'scratch operand']
  %s0 = inlined_call_operand.vmem [shape: f32[32,32], index: 0, kind: input, shape index: {}]
  %s1 = inlined_call_operand.vmem [shape: bf16[32,128], index: 1, kind: input, shape index: {}]
  %s2 = inlined_call_operand.vmem [shape: bf16[32,128], index: 2, kind: output, shape index: {}]
  %s3 = sld [smem:[#allocation0]]
  $region26: #{sparse_attention_forward.3} parent=0
    _
  %s5 = ssub.s32 1, %s3
  %s6 = scalar_select 0, %s5, %s3
  // Predicated region
  $region2: #{sparse_attention_forward.3} parent=0 // pred_check
    _
  $region3: #{sparse_attention_forward.3} parent=0 // pred_check_branch
    %8 = sbr.rel (0) target = $region5
  $region4: #{sparse_attention_forward.3} parent=0 // pred_region
    _
  $region5: #{sparse_attention_forward.3} parent=0 // pred_fallthru
    _
  // Predicated region
  $region6: #{sparse_attention_forward.3} parent=0 // pred_check
    _
  $region7: #{sparse_attention_forward.3} parent=0 // pred_check_branch
    %10 = sbr.rel (0) target = $region9
  $region8: #{sparse_attention_forward.3} parent=0 // pred_region
    _
  $region9: #{sparse_attention_forward.3} parent=0 // pred_fallthru
    _
  %p12 = scmp.eq.s32.totalorder 0, 0
  // Predicated region
  $region10: #{sparse_attention_forward.3} parent=0 // pred_check
    %p13 = pneg %p12
  $region11: #{sparse_attention_forward.3} parent=0 // pred_check_branch
    %15 = sbr.rel (%p13) target = $region13
  $region12: #{sparse_attention_forward.3} parent=0 // pred_region
    %16 = vst [vmem:[#allocation2] sm:$0xff] 0.0
    %17 = vst [vmem:[#allocation2 + $0x8] sm:$0xff] 0.0
    %18 = vst [vmem:[#allocation2 + $0x10] sm:$0xff] 0.0
    %19 = vst [vmem:[#allocation2 + $0x18] sm:$0xff] 0.0
  $region13: #{sparse_attention_forward.3} parent=0 // pred_fallthru
    _
  %v20 = vld [vmem:[#allocation2] sm:$0xff]
  %v21 = vld [vmem:[#allocation2 + $0x8] sm:$0xff]
  %v22 = vld [vmem:[#allocation2 + $0x10] sm:$0xff]
  %v23 = vld [vmem:[#allocation2 + $0x18] sm:$0xff]
  %v24 = vld [vmem:[%s0] sm:$0xff]
  %v25 = vld [vmem:[%s0 + $0x8] sm:$0xff]
  %v26 = vld [vmem:[%s0 + $0x10] sm:$0xff]
  %v27 = vld [vmem:[%s0 + $0x18] sm:$0xff]
  %v28 = vpack.c.bf16 %v25, %v24
  %v29 = vpack.c.bf16 %v27, %v26
  %v30 = vld [vmem:[%s1] sm:$0xf]
  %v31 = vld [vmem:[%s1 + $0x4] sm:$0xf]
  %v32 = vld [vmem:[%s1 + $0x8] sm:$0xf]
  %v33 = vld [vmem:[%s1 + $0xc] sm:$0xf]
  %v38 = vunpack.c.l.b16 %v30
  %v39 = vunpack.c.l.b16 %v31
  %v40 = vunpack.c.l.b16 %v32
  %v41 = vunpack.c.l.b16 %v33
  %v42 = vpack.c.b16 %v39, %v38
  %v43 = vpack.c.b16 %v41, %v40
  %vm46 = vcmask 261120
  %v48 = vsel %vm46, %v28, 0
  %v51 = vsel %vm46, %v29, 0
  %53 = vmatpush.bf16.msra.mxu0 0
  %54 = vmatpush.bf16.msra.mxu0 0
  %55 = vmatpush.bf16.msra.mxu0 0
  %56 = vmatpush.bf16.msra.mxu0 0
  %57 = vmatpush.bf16.msra.mxu0 0
  %58 = vmatpush.bf16.msra.mxu0 0
  %59 = vmatpush.bf16.msra.mxu0 %v43
  %60 = vmatpush.bf16.msra.mxu0 %v42
  %61 = vmatmul.bf16.gmra.mxu0 %v48
  %v62 = vpop.f32.mrf.mxu0
  %v63 = vadd.f32 0.0, %v62
  %v64 = vpop.f32.mrf.mxu0
  %v65 = vadd.f32 0.0, %v64
  %66 = vmatmul.bf16.gmra.mxu0 %v51
  %v67 = vpop.f32.mrf.mxu0
  %v68 = vadd.f32 0.0, %v67
  %v69 = vpop.f32.mrf.mxu0
  %v70 = vadd.f32 0.0, %v69
  %71 = vdwg.mxu0
  %v72 = vadd.f32 %v20, %v63
  %v73 = vadd.f32 %v21, %v65
  %v74 = vadd.f32 %v22, %v68
  %v75 = vadd.f32 %v23, %v70
  %76 = vst [vmem:[#allocation2] sm:$0xff] %v72
  %77 = vst [vmem:[#allocation2 + $0x8] sm:$0xff] %v73
  %78 = vst [vmem:[#allocation2 + $0x10] sm:$0xff] %v74
  %79 = vst [vmem:[#allocation2 + $0x18] sm:$0xff] %v75
  // Predicated region
  $region14: #{sparse_attention_forward.3} parent=0 // pred_check
    %p80 = pneg %p12
  $region15: #{sparse_attention_forward.3} parent=0 // pred_check_branch
    %82 = sbr.rel (%p80) target = $region17
  $region16: #{sparse_attention_forward.3} parent=0 // pred_region
    %v83 = vld [vmem:[#allocation2] sm:$0xff]
    %v84 = vld [vmem:[#allocation2 + $0x8] sm:$0xff]
    %v85 = vld [vmem:[#allocation2 + $0x10] sm:$0xff]
    %v86 = vld [vmem:[#allocation2 + $0x18] sm:$0xff]
    %v87 = vpack.c.bf16 %v83, %v83
    %v88 = vpack.c.bf16 %v84, %v84
    %v89 = vpack.c.bf16 %v85, %v85
    %v90 = vpack.c.bf16 %v86, %v86
    %91 = vst [vmem:[%s2] sm:$0xf] %v87
    %92 = vst [vmem:[%s2 + $0x4] sm:$0xf] %v88
    %93 = vst [vmem:[%s2 + $0x8] sm:$0xf] %v89
    %94 = vst [vmem:[%s2 + $0xc] sm:$0xf] %v90
  $region17: #{sparse_attention_forward.3} parent=0 // pred_fallthru
    _
  // Predicated region
  $region18: #{sparse_attention_forward.3} parent=0 // pred_check
    _
  $region19: #{sparse_attention_forward.3} parent=0 // pred_check_branch
    %96 = sbr.rel (0) target = $region21
  $region20: #{sparse_attention_forward.3} parent=0 // pred_region
    _
  $region21: #{sparse_attention_forward.3} parent=0 // pred_fallthru
    _
  // Predicated region
  $region22: #{sparse_attention_forward.3} parent=0 // pred_check
    _
  $region23: #{sparse_attention_forward.3} parent=0 // pred_check_branch
    %98 = sbr.rel (0) target = $region25
  $region24: #{sparse_attention_forward.3} parent=0 // pred_region
    _
  $region25: #{sparse_attention_forward.3} parent=0 // pred_fallthru
    _

// kernel: sparse_attention_forward.5
$region0: #{sparse_attention_forward.5}
  #allocation0 [shape = 'u32[]', space=smem, size = 0x4, offset = 0x4, fixed_abs, tag = 'smem constant byte address 0x4 - core index']
  #allocation1 [shape = 'u32[72,128]{1,0:T(1,128)}', space=vmem, size = 0x9000, scoped, tag = 'internal scratch']
  #allocation2 [shape = 'f32[32,128]{1,0:T(8,128)}', space=vmem, size = 0x4000, scoped, tag = 'scratch operand']
  %s0 = inlined_call_operand.vmem [shape: bf16[32,32], index: 0, kind: input, shape index: {}]
  %s1 = inlined_call_operand.vmem [shape: bf16[32,128], index: 1, kind: input, shape index: {}]
  %s2 = inlined_call_operand.vmem [shape: f32[1,128], index: 2, kind: input, shape index: {}]
  %s3 = inlined_call_operand.hbm [shape: f32[32,128], index: 3, kind: output, shape index: {}]
  %s4 = sld [smem:[#allocation0]]
  $region30: #{sparse_attention_forward.5} parent=0
    _
  %s6 = ssub.s32 1, %s4
  %s7 = scalar_select 0, %s6, %s4
  $region1: #{sparse_attention_forward.5} parent=0
    #allocation3 [shape = 'u8[16384]{0}', space=vmem, size = 0x4000, scoped, tag = 'output window, operand 0, single buffered']
    #allocation4 [shape = 's32[1]{0}', space=sflag, size = 0x4, scoped, tag = 'scoped memory for sparse_attention_forward.5']
    %8 = vsyncpa [#allocation4], 0
    // Predicated region
    $region2: #{sparse_attention_forward.5} parent=1 // pred_check
      _
    $region3: #{sparse_attention_forward.5} parent=1 // pred_check_branch
      %10 = sbr.rel (0) target = $region5
    $region4: #{sparse_attention_forward.5} parent=1 // pred_region
      _
    $region5: #{sparse_attention_forward.5} parent=1 // pred_fallthru
      _
    // Predicated region
    $region6: #{sparse_attention_forward.5} parent=1 // pred_check
      _
    $region7: #{sparse_attention_forward.5} parent=1 // pred_check_branch
      %12 = sbr.rel (0) target = $region9
    $region8: #{sparse_attention_forward.5} parent=1 // pred_region
      _
    $region9: #{sparse_attention_forward.5} parent=1 // pred_fallthru
      _
    // Predicated region
    $region10: #{sparse_attention_forward.5} parent=1 // pred_check
      _
    $region11: #{sparse_attention_forward.5} parent=1 // pred_check_branch
      %14 = sbr.rel (0) target = $region13
    $region12: #{sparse_attention_forward.5} parent=1 // pred_region
      _
    $region13: #{sparse_attention_forward.5} parent=1 // pred_fallthru
      _
    %p16 = scmp.eq.s32.totalorder 0, 0
    // Predicated region
    $region14: #{sparse_attention_forward.5} parent=1 // pred_check
      %p17 = pneg %p16
    $region15: #{sparse_attention_forward.5} parent=1 // pred_check_branch
      %19 = sbr.rel (%p17) target = $region17
    $region16: #{sparse_attention_forward.5} parent=1 // pred_region
      %20 = vst [vmem:[#allocation2] sm:$0xff] 0.0
      %21 = vst [vmem:[#allocation2 + $0x8] sm:$0xff] 0.0
      %22 = vst [vmem:[#allocation2 + $0x10] sm:$0xff] 0.0
      %23 = vst [vmem:[#allocation2 + $0x18] sm:$0xff] 0.0
    $region17: #{sparse_attention_forward.5} parent=1 // pred_fallthru
      _
    %v24 = vld [vmem:[#allocation2] sm:$0xff]
    %v25 = vld [vmem:[#allocation2 + $0x8] sm:$0xff]
    %v26 = vld [vmem:[#allocation2 + $0x10] sm:$0xff]
    %v27 = vld [vmem:[#allocation2 + $0x18] sm:$0xff]
    %v28 = vld [vmem:[%s0] sm:$0xf]
    %v29 = vld [vmem:[%s0 + $0x4] sm:$0xf]
    %v30 = vld [vmem:[%s0 + $0x8] sm:$0xf]
    %v31 = vld [vmem:[%s0 + $0xc] sm:$0xf]
    %v32 = vld [vmem:[%s1] sm:$0xf]
    %v33 = vld [vmem:[%s1 + $0x4] sm:$0xf]
    %v34 = vld [vmem:[%s1 + $0x8] sm:$0xf]
    %v35 = vld [vmem:[%s1 + $0xc] sm:$0xf]
    %v40 = vunpack.c.l.b16 %v28
    %v41 = vunpack.c.l.b16 %v29
    %v42 = vunpack.c.l.b16 %v30
    %v43 = vunpack.c.l.b16 %v31
    %v44 = vpack.c.b16 %v41, %v40
    %v45 = vpack.c.b16 %v43, %v42
    %v50 = vunpack.c.l.b16 %v32
    %v51 = vunpack.c.l.b16 %v33
    %v52 = vunpack.c.l.b16 %v34
    %v53 = vunpack.c.l.b16 %v35
    %v54 = vpack.c.b16 %v51, %v50
    %v55 = vpack.c.b16 %v53, %v52
    %vm58 = vcmask 261120
    %v60 = vsel %vm58, %v44, 0
    %v63 = vsel %vm58, %v45, 0
    %65 = vmatpush.bf16.msra.mxu0 0
    %66 = vmatpush.bf16.msra.mxu0 0
    %67 = vmatpush.bf16.msra.mxu0 0
    %68 = vmatpush.bf16.msra.mxu0 0
    %69 = vmatpush.bf16.msra.mxu0 0
    %70 = vmatpush.bf16.msra.mxu0 0
    %71 = vmatpush.bf16.msra.mxu0 %v55
    %72 = vmatpush.bf16.msra.mxu0 %v54
    %73 = vmatmul.bf16.gmra.mxu0 %v60
    %v74 = vpop.f32.mrf.mxu0
    %v75 = vadd.f32 0.0, %v74
    %v76 = vpop.f32.mrf.mxu0
    %v77 = vadd.f32 0.0, %v76
    %78 = vmatmul.bf16.gmra.mxu0 %v63
    %v79 = vpop.f32.mrf.mxu0
    %v80 = vadd.f32 0.0, %v79
    %v81 = vpop.f32.mrf.mxu0
    %v82 = vadd.f32 0.0, %v81
    %83 = vdwg.mxu0
    %v84 = vadd.f32 %v24, %v75
    %v85 = vadd.f32 %v25, %v77
    %v86 = vadd.f32 %v26, %v80
    %v87 = vadd.f32 %v27, %v82
    %88 = vst [vmem:[#allocation2] sm:$0xff] %v84
    %89 = vst [vmem:[#allocation2 + $0x8] sm:$0xff] %v85
    %90 = vst [vmem:[#allocation2 + $0x10] sm:$0xff] %v86
    %91 = vst [vmem:[#allocation2 + $0x18] sm:$0xff] %v87
    // Predicated region
    $region18: #{sparse_attention_forward.5} parent=1 // pred_check
      %p92 = pneg %p16
    $region19: #{sparse_attention_forward.5} parent=1 // pred_check_branch
      %94 = sbr.rel (%p92) target = $region21
    $region20: #{sparse_attention_forward.5} parent=1 // pred_region
      %v95 = vld [vmem:[#allocation2] sm:$0xff]
      %v96 = vld [vmem:[#allocation2 + $0x8] sm:$0xff]
      %v97 = vld [vmem:[#allocation2 + $0x10] sm:$0xff]
      %v98 = vld [vmem:[#allocation2 + $0x18] sm:$0xff]
      %v99 = vld [vmem:[%s2] sm:$0x1]
      %v101 = vperm.slane %v99, 0
      %v103 = vadd.f32 %v95, %v101
      %v104 = vadd.f32 %v96, %v101
      %v105 = vadd.f32 %v97, %v101
      %v106 = vadd.f32 %v98, %v101
      %107 = vst [vmem:[#allocation3] sm:$0xff] %v103
      %108 = vst [vmem:[#allocation3 + $0x8] sm:$0xff] %v104
      %109 = vst [vmem:[#allocation3 + $0x10] sm:$0xff] %v105
      %110 = vst [vmem:[#allocation3 + $0x18] sm:$0xff] %v106
    $region21: #{sparse_attention_forward.5} parent=1 // pred_fallthru
      _
    // Predicated region
    $region22: #{sparse_attention_forward.5} parent=1 // pred_check
      _
    $region23: #{sparse_attention_forward.5} parent=1 // pred_check_branch
      %112 = sbr.rel (0) target = $region25
    $region24: #{sparse_attention_forward.5} parent=1 // pred_region
      %114 = vsyncadd [#allocation4], 0
      %s115 = sshll.u32 [#allocation3], 4
      %s116 = int_to_ptr.vmem [resolvable:$true] %s115
      %s117 = sshll.u32 %s3, 4
      %s118 = int_to_ptr.hbm [resolvable:$true] %s117
      %123 = dma.vmem_to_hbm [thread:$0]  %s116, 512, %s118, [#allocation4], 128, 128, 8
    $region25: #{sparse_attention_forward.5} parent=1 // pred_fallthru
      _
    // Predicated region
    $region26: #{sparse_attention_forward.5} parent=1 // pred_check
      _
    $region27: #{sparse_attention_forward.5} parent=1 // pred_check_branch
      %125 = sbr.rel (0) target = $region29
    $region28: #{sparse_attention_forward.5} parent=1 // pred_region
      %127 = dma.done [#allocation4], 512
    $region29: #{sparse_attention_forward.5} parent=1 // pred_fallthru
      _
    %128 = vsyncpa [#allocation4], 1

// kernel: sparse_attention_forward.4
$region0: #{sparse_attention_forward.4}
  #allocation0 [shape = 'u32[]', space=smem, size = 0x4, offset = 0x4, fixed_abs, tag = 'smem constant byte address 0x4 - core index']
  #allocation1 [shape = 'u32[72,128]{1,0:T(1,128)}', space=vmem, size = 0x9000, scoped, tag = 'internal scratch']
  %s0 = inlined_call_operand.vmem [shape: s32[2,2,16,8], index: 0, kind: input, shape index: {}]
  %s1 = inlined_call_operand.vmem [shape: f32[2,2,16,8], index: 1, kind: input, shape index: {}]
  %s2 = inlined_call_operand.vmem [shape: bf16[2,16,32], index: 2, kind: input, shape index: {}]
  %s3 = inlined_call_operand.vmem [shape: bf16[2,16,64], index: 3, kind: input, shape index: {}]
  %s4 = inlined_call_operand.vmem [shape: bf16[2,16,32], index: 4, kind: output, shape index: {}]
  %s5 = sld [smem:[#allocation0]]
  $region49: #{sparse_attention_forward.4} parent=0
    _
  %s7 = ssub.s32 1, %s5
  %s8 = scalar_select 0, %s7, %s5
  loop: start=0, step=1, limit=4
  $region2: #{sparse_attention_forward.4} parent=0 // loop_pre_header
    _
  $region3: #{sparse_attention_forward.4} parent=0 // loop_header
    %s10 = sphi 0, %s14
    %p11 = scmp.ge.s32.totalorder %s10, 4
    %s17 = sphi 0, %s29
    %s18 = sphi 0, %s25
    %s19 = sphi 0, %s17
    %s20 = sphi 0, %s18
    %s21 = sphi 0, %s19
    %s22 = sphi 0, %s20
    %s34 = sphi 0, %s36
    %s37 = sphi 0, %s34
    %s38 = sphi 0, %s37
    %s54 = sphi 0, %s38
    %s62 = sphi 0, %s64
    %s65 = sphi 0, %s62
    %s66 = sphi 0, %s65
    %s82 = sphi 0, %s66
    %s90 = sphi 0, %s92
    %s93 = sphi 0, %s90
    %s94 = sphi 0, %s93
    %s110 = sphi 0, %s94
    %s116 = sphi 0, %s118
    %s119 = sphi 0, %s116
    %s120 = sphi 0, %s119
    %s136 = sphi 0, %s120
    %s144 = sphi 0, %s146
    %s147 = sphi 0, %s144
    %s148 = sphi 0, %s147
    %s164 = sphi 0, %s148
  $region4: #{sparse_attention_forward.4} parent=0 // loop_header_branch
    %13 = sbr.rel (%p11) target = $region8
  $region5: #{sparse_attention_forward.4} parent=0 // loop_body
    %s15 = ssub.s32 %s10, 1
    %s16 = ssub.s32 %s10, 2
    %s23 = sadd.s32 1, %s18
    %p24 = scmp.ge.s32.totalorder %s23, 1
    %s25 = scalar_select %p24, 0, %s23
    %s26 = sadd.s32 1, %s17
    %s27 = scalar_select %p24, %s26, %s17
    %p28 = scmp.ge.s32.totalorder %s27, 2
    %s29 = scalar_select %p28, 0, %s27
    %s30 = ssub.s32 %s17, %s29
    %s31 = ssub.s32 %s18, %s25
    %s32 = sor.u32 %s30, %s31
    %p33 = scmp.eq.s32.totalorder %s32, 0
    %s35 = sadd.s32 %s34, 1
    %s36 = scalar_select %p33, %s34, %s35
    %p39 = pneg %p33
    %p40 = scmp.eq.s32.totalorder %s10, 1
    %p41 = por %p39, %p40
    %p42 = scmp.ne.s32.totalorder %s34, %s37
    %p43 = scmp.eq.s32.totalorder %s10, 0
    %p44 = por %p42, %p43
    %p45 = scmp.ne.s32.totalorder %s34, %s37
    %p46 = scmp.eq.s32.totalorder %s15, 1
    %p47 = por %p45, %p46
    %p48 = scmp.ne.s32.totalorder %s37, %s38
    %p49 = scmp.eq.s32.totalorder %s15, 0
    %p50 = por %p48, %p49
    %p51 = scmp.ne.s32.totalorder %s37, %s38
    %p52 = scmp.eq.s32.totalorder %s16, 1
    %p53 = por %p51, %p52
    %p55 = scmp.ne.s32.totalorder %s38, %s54
    %p56 = scmp.eq.s32.totalorder %s16, 0
    %p57 = por %p55, %p56
    %s58 = ssub.s32 %s17, %s29
    %s59 = ssub.s32 %s18, %s25
    %s60 = sor.u32 %s58, %s59
    %p61 = scmp.eq.s32.totalorder %s60, 0
    %s63 = sadd.s32 %s62, 1
    %s64 = scalar_select %p61, %s62, %s63
    %p67 = pneg %p61
    %p68 = scmp.eq.s32.totalorder %s10, 1
    %p69 = por %p67, %p68
    %p70 = scmp.ne.s32.totalorder %s62, %s65
    %p71 = scmp.eq.s32.totalorder %s10, 0
    %p72 = por %p70, %p71
    %p73 = scmp.ne.s32.totalorder %s62, %s65
    %p74 = scmp.eq.s32.totalorder %s15, 1
    %p75 = por %p73, %p74
    %p76 = scmp.ne.s32.totalorder %s65, %s66
    %p77 = scmp.eq.s32.totalorder %s15, 0
    %p78 = por %p76, %p77
    %p79 = scmp.ne.s32.totalorder %s65, %s66
    %p80 = scmp.eq.s32.totalorder %s16, 1
    %p81 = por %p79, %p80
    %p83 = scmp.ne.s32.totalorder %s66, %s82
    %p84 = scmp.eq.s32.totalorder %s16, 0
    %p85 = por %p83, %p84
    %s86 = ssub.s32 %s17, %s29
    %s87 = ssub.s32 %s18, %s25
    %s88 = sor.u32 %s86, %s87
    %p89 = scmp.eq.s32.totalorder %s88, 0
    %s91 = sadd.s32 %s90, 1
    %s92 = scalar_select %p89, %s90, %s91
    %p95 = pneg %p89
    %p96 = scmp.eq.s32.totalorder %s10, 1
    %p97 = por %p95, %p96
    %p98 = scmp.ne.s32.totalorder %s90, %s93
    %p99 = scmp.eq.s32.totalorder %s10, 0
    %p100 = por %p98, %p99
    %p101 = scmp.ne.s32.totalorder %s90, %s93
    %p102 = scmp.eq.s32.totalorder %s15, 1
    %p103 = por %p101, %p102
    %p104 = scmp.ne.s32.totalorder %s93, %s94
    %p105 = scmp.eq.s32.totalorder %s15, 0
    %p106 = por %p104, %p105
    %p107 = scmp.ne.s32.totalorder %s93, %s94
    %p108 = scmp.eq.s32.totalorder %s16, 1
    %p109 = por %p107, %p108
    %p111 = scmp.ne.s32.totalorder %s94, %s110
    %p112 = scmp.eq.s32.totalorder %s16, 0
    %p113 = por %p111, %p112
    %s114 = ssub.s32 %s17, %s29
    %p115 = scmp.eq.s32.totalorder %s114, 0
    %s117 = sadd.s32 %s116, 1
    %s118 = scalar_select %p115, %s116, %s117
    %p121 = pneg %p115
    %p122 = scmp.eq.s32.totalorder %s10, 1
    %p123 = por %p121, %p122
    %p124 = scmp.ne.s32.totalorder %s116, %s119
    %p125 = scmp.eq.s32.totalorder %s10, 0
    %p126 = por %p124, %p125
    %p127 = scmp.ne.s32.totalorder %s116, %s119
    %p128 = scmp.eq.s32.totalorder %s15, 1
    %p129 = por %p127, %p128
    %p130 = scmp.ne.s32.totalorder %s119, %s120
    %p131 = scmp.eq.s32.totalorder %s15, 0
    %p132 = por %p130, %p131
    %p133 = scmp.ne.s32.totalorder %s119, %s120
    %p134 = scmp.eq.s32.totalorder %s16, 1
    %p135 = por %p133, %p134
    %p137 = scmp.ne.s32.totalorder %s120, %s136
    %p138 = scmp.eq.s32.totalorder %s16, 0
    %p139 = por %p137, %p138
    %s140 = ssub.s32 %s17, %s29
    %s141 = ssub.s32 %s18, %s25
    %s142 = sor.u32 %s140, %s141
    %p143 = scmp.eq.s32.totalorder %s142, 0
    %s145 = sadd.s32 %s144, 1
    %s146 = scalar_select %p143, %s144, %s145
    %p149 = pneg %p143
    %p150 = scmp.eq.s32.totalorder %s10, 1
    %p151 = por %p149, %p150
    %p152 = scmp.ne.s32.totalorder %s144, %s147
    %p153 = scmp.eq.s32.totalorder %s10, 0
    %p154 = por %p152, %p153
    %p155 = scmp.ne.s32.totalorder %s144, %s147
    %p156 = scmp.eq.s32.totalorder %s15, 1
    %p157 = por %p155, %p156
    %p158 = scmp.ne.s32.totalorder %s147, %s148
    %p159 = scmp.eq.s32.totalorder %s15, 0
    %p160 = por %p158, %p159
    %p161 = scmp.ne.s32.totalorder %s147, %s148
    %p162 = scmp.eq.s32.totalorder %s16, 1
    %p163 = por %p161, %p162
    %p165 = scmp.ne.s32.totalorder %s148, %s164
    %p166 = scmp.eq.s32.totalorder %s16, 0
    %p167 = por %p165, %p166
    %p168 = scmp.le.s32.totalorder 1, %s10
    %p169 = scmp.lt.s32.totalorder %s10, 3
    %p170 = pnand %p168, %p169
    %p171 = pneg %p170
    // Predicated region
    $region9: #{sparse_attention_forward.4} parent=5 // pred_check
      _
    $region10: #{sparse_attention_forward.4} parent=5 // pred_check_branch
      %173 = sbr.rel (%p170) target = $region12
    $region11: #{sparse_attention_forward.4} parent=5 // pred_region
      %s174 = ssub.s32 %s10, 1
    $region12: #{sparse_attention_forward.4} parent=5 // pred_fallthru
      _
    %p175 = scmp.lt.s32.totalorder %s10, 2
    // Predicated region
    $region13: #{sparse_attention_forward.4} parent=5 // pred_check
      %p176 = pneg %p175
    $region14: #{sparse_attention_forward.4} parent=5 // pred_check_branch
      %178 = sbr.rel (%p176) target = $region16
    $region15: #{sparse_attention_forward.4} parent=5 // pred_region
      // Predicated region
      $region17: #{sparse_attention_forward.4} parent=15 // pred_check
        %p179 = pneg %p44
      $region18: #{sparse_attention_forward.4} parent=15 // pred_check_branch
        %181 = sbr.rel (%p179) target = $region20
      $region19: #{sparse_attention_forward.4} parent=15 // pred_region
        %s182 = smul.u32 2, %s18
        %p183 = scmp.lt.s32.totalorder %s17, 1
        %s184 = scalar_select %p183, %s17, 1
        %p185 = scmp.lt.s32.totalorder %s182, 1
        %s186 = scalar_select %p185, %s182, 1
        %s187 = smul.addr %s184, 4
        %s188 = sadd.s32 %s186, %s187
        %s189 = smul.addr %s188, 8
        %s190 = scalar_lea.vmem %s0, %s189
        %s191 = smul.u32 2, %s18
      $region20: #{sparse_attention_forward.4} parent=15 // pred_fallthru
        _
      // Predicated region
      $region21: #{sparse_attention_forward.4} parent=15 // pred_check
        %p192 = pneg %p72
      $region22: #{sparse_attention_forward.4} parent=15 // pred_check_branch
        %194 = sbr.rel (%p192) target = $region24
      $region23: #{sparse_attention_forward.4} parent=15 // pred_region
        %s195 = smul.u32 2, %s18
        %p196 = scmp.lt.s32.totalorder %s17, 1
        %s197 = scalar_select %p196, %s17, 1
        %p198 = scmp.lt.s32.totalorder %s195, 1
        %s199 = scalar_select %p198, %s195, 1
        %s200 = smul.addr %s197, 4
        %s201 = sadd.s32 %s199, %s200
        %s202 = smul.addr %s201, 8
        %s203 = scalar_lea.vmem %s1, %s202
        %s204 = smul.u32 2, %s18
      $region24: #{sparse_attention_forward.4} parent=15 // pred_fallthru
        _
      // Predicated region
      $region25: #{sparse_attention_forward.4} parent=15 // pred_check
        %p205 = pneg %p100
      $region26: #{sparse_attention_forward.4} parent=15 // pred_check_branch
        %207 = sbr.rel (%p205) target = $region28
      $region27: #{sparse_attention_forward.4} parent=15 // pred_region
        %s208 = smul.u32 2, %s18
        %p209 = scmp.lt.s32.totalorder %s17, 1
        %s210 = scalar_select %p209, %s17, 1
        %p211 = scmp.lt.s32.totalorder %s208, 1
        %s212 = scalar_select %p211, %s208, 1
        %s213 = smul.addr %s210, 2
        %s214 = sadd.s32 %s212, %s213
        %s215 = smul.addr %s214, 4
        %s216 = scalar_lea.vmem %s2, %s215
        %s217 = smul.u32 2, %s18
      $region28: #{sparse_attention_forward.4} parent=15 // pred_fallthru
        _
      // Predicated region
      $region29: #{sparse_attention_forward.4} parent=15 // pred_check
        %p218 = pneg %p126
      $region30: #{sparse_attention_forward.4} parent=15 // pred_check_branch
        %220 = sbr.rel (%p218) target = $region32
      $region31: #{sparse_attention_forward.4} parent=15 // pred_region
        %p221 = scmp.lt.s32.totalorder %s17, 1
        %s222 = scalar_select %p221, %s17, 1
        %s223 = smul.addr %s222, 2
        %s224 = smul.addr %s223, 4
        %s225 = scalar_lea.vmem %s3, %s224
      $region32: #{sparse_attention_forward.4} parent=15 // pred_fallthru
        _
    $region16: #{sparse_attention_forward.4} parent=5 // pred_fallthru
      _
    %p226 = scmp.le.s32.totalorder 1, %s10
    %p227 = scmp.lt.s32.totalorder %s10, 3
    %p228 = pnand %p226, %p227
    %p229 = pneg %p228
    // Predicated region
    $region33: #{sparse_attention_forward.4} parent=5 // pred_check
      _
    $region34: #{sparse_attention_forward.4} parent=5 // pred_check_branch
      %231 = sbr.rel (%p228) target = $region36
    $region35: #{sparse_attention_forward.4} parent=5 // pred_region
      %s232 = ssub.s32 %s10, 1
      %s233 = smul.u32 2, %s20
      %p234 = scmp.lt.s32.totalorder %s19, 1
      %s235 = scalar_select %p234, %s19, 1
      %p236 = scmp.lt.s32.totalorder %s233, 1
      %s237 = scalar_select %p236, %s233, 1
      %s238 = smul.addr %s235, 4
      %s239 = sadd.s32 %s237, %s238
      %s240 = smul.addr %s239, 8
      %s241 = scalar_lea.vmem %s0, %s240
      %p242 = pneg %p50
      %p243 = pneg %p47
      %s244 = smul.u32 2, %s20
      %p245 = scmp.lt.s32.totalorder %s19, 1
      %s246 = scalar_select %p245, %s19, 1
      %p247 = scmp.lt.s32.totalorder %s244, 1
      %s248 = scalar_select %p247, %s244, 1
      %s249 = smul.addr %s246, 4
      %s250 = sadd.s32 %s248, %s249
      %s251 = smul.addr %s250, 8
      %s252 = scalar_lea.vmem %s1, %s251
      %p253 = pneg %p78
      %p254 = pneg %p75
      %s255 = smul.u32 2, %s20
      %p256 = scmp.lt.s32.totalorder %s19, 1
      %s257 = scalar_select %p256, %s19, 1
      %p258 = scmp.lt.s32.totalorder %s255, 1
      %s259 = scalar_select %p258, %s255, 1
      %s260 = smul.addr %s257, 2
      %s261 = sadd.s32 %s259, %s260
      %s262 = smul.addr %s261, 4
      %s263 = scalar_lea.vmem %s2, %s262
      %p264 = pneg %p106
      %p265 = pneg %p103
      %p266 = scmp.lt.s32.totalorder %s19, 1
      %s267 = scalar_select %p266, %s19, 1
      %s268 = smul.addr %s267, 2
      %s269 = smul.addr %s268, 4
      %s270 = scalar_lea.vmem %s3, %s269
      %p271 = pneg %p132
      %p272 = pneg %p129
      %p273 = pneg %p160
      %p274 = pneg %p157
      %s275 = smul.u32 2, %s20
      %p276 = scmp.lt.s32.totalorder %s19, 1
      %s277 = scalar_select %p276, %s19, 1
      %p278 = scmp.lt.s32.totalorder %s275, 1
      %s279 = scalar_select %p278, %s275, 1
      %s280 = smul.addr %s277, 2
      %s281 = sadd.s32 %s279, %s280
      %s282 = smul.addr %s281, 4
      %s283 = scalar_lea.vmem %s4, %s282
      %s284 = smul.u32 2, %s20
      %p285 = scmp.lt.s32.totalorder %s19, 1
      %s286 = scalar_select %p285, %s19, 1
      %p287 = scmp.lt.s32.totalorder %s284, 1
      %s288 = scalar_select %p287, %s284, 1
      %s289 = smul.addr %s286, 4
      %s290 = sadd.s32 %s288, %s289
      %s291 = smul.addr %s290, 8
      %s292 = scalar_lea.vmem %s0, %s291
      %s293 = smul.u32 2, %s20
      %s294 = smul.u32 2, %s20
      %p295 = scmp.lt.s32.totalorder %s19, 1
      %s296 = scalar_select %p295, %s19, 1
      %p297 = scmp.lt.s32.totalorder %s294, 1
      %s298 = scalar_select %p297, %s294, 1
      %s299 = smul.addr %s296, 4
      %s300 = sadd.s32 %s298, %s299
      %s301 = smul.addr %s300, 8
      %s302 = scalar_lea.vmem %s1, %s301
      %s303 = smul.u32 2, %s20
      %s304 = smul.u32 2, %s20
      %p305 = scmp.lt.s32.totalorder %s19, 1
      %s306 = scalar_select %p305, %s19, 1
      %p307 = scmp.lt.s32.totalorder %s304, 1
      %s308 = scalar_select %p307, %s304, 1
      %s309 = smul.addr %s306, 2
      %s310 = sadd.s32 %s308, %s309
      %s311 = smul.addr %s310, 4
      %s312 = scalar_lea.vmem %s2, %s311
      %s313 = smul.u32 2, %s20
      %p314 = scmp.lt.s32.totalorder %s19, 1
      %s315 = scalar_select %p314, %s19, 1
      %s316 = smul.addr %s315, 2
      %s317 = smul.addr %s316, 4
      %s318 = scalar_lea.vmem %s3, %s317
      %s319 = smul.u32 2, %s20
      %p320 = scmp.lt.s32.totalorder %s19, 1
      %s321 = scalar_select %p320, %s19, 1
      %p322 = scmp.lt.s32.totalorder %s319, 1
      %s323 = scalar_select %p322, %s319, 1
      %s324 = smul.addr %s321, 2
      %s325 = sadd.s32 %s323, %s324
      %s326 = smul.addr %s325, 4
      %s327 = scalar_lea.vmem %s4, %s326
      %s328 = smul.u32 2, %s20
      %v330 = vlaneseq
      %v331 = vand.u32 %v330, 127
      %v332 = vld [vmem:[%s312] sm:$0xf]
      %v333 = vld [vmem:[%s312 + $0x4] sm:$0xf]
      %v334 = vld [vmem:[%s318] sm:$0xf]
      %v335 = vld [vmem:[%s318 + $0x4] sm:$0xf]
      %v336 = vld [vmem:[%s292] sm:$0xff]
      %v337 = vld [vmem:[%s292 + $0x8] sm:$0xff]
      %v338 = vperm.slane %v336, 0
      %v339 = vlaneseq
      %v340 = vshrl.u32 %v339, 7
      %342 = vset.pattern.permute.xlu0 %v340
      %343 = vperm.xlu0 %342, %v338
      %v344 = vpop.permute.xlu0 %343
      %v345 = vperm.slane %v336, 1
      %v346 = vlaneseq
      %v347 = vshrl.u32 %v346, 7
      %349 = vset.pattern.permute.xlu0 %v347
      %350 = vperm.xlu0 %349, %v345
      %v351 = vpop.permute.xlu0 %350
      %v352 = vperm.slane %v336, 2
      %v353 = vlaneseq
      %v354 = vshrl.u32 %v353, 7
      %356 = vset.pattern.permute.xlu0 %v354
      %357 = vperm.xlu0 %356, %v352
      %v358 = vpop.permute.xlu0 %357
      %v359 = vperm.slane %v336, 3
      %v360 = vlaneseq
      %v361 = vshrl.u32 %v360, 7
      %363 = vset.pattern.permute.xlu0 %v361
      %364 = vperm.xlu0 %363, %v359
      %v365 = vpop.permute.xlu0 %364
      %v366 = vperm.slane %v336, 4
      %v367 = vlaneseq
      %v368 = vshrl.u32 %v367, 7
      %370 = vset.pattern.permute.xlu0 %v368
      %371 = vperm.xlu0 %370, %v366
      %v372 = vpop.permute.xlu0 %371
      %v373 = vperm.slane %v336, 5
      %v374 = vlaneseq
      %v375 = vshrl.u32 %v374, 7
      %377 = vset.pattern.permute.xlu0 %v375
      %378 = vperm.xlu0 %377, %v373
      %v379 = vpop.permute.xlu0 %378
      %v380 = vperm.slane %v336, 6
      %v381 = vlaneseq
      %v382 = vshrl.u32 %v381, 7
      %384 = vset.pattern.permute.xlu0 %v382
      %385 = vperm.xlu0 %384, %v380
      %v386 = vpop.permute.xlu0 %385
      %v387 = vperm.slane %v336, 7
      %v388 = vlaneseq
      %v389 = vshrl.u32 %v388, 7
      %391 = vset.pattern.permute.xlu0 %v389
      %392 = vperm.xlu0 %391, %v387
      %v393 = vpop.permute.xlu0 %392
      %v394 = vperm.slane %v337, 0
      %v395 = vlaneseq
      %v396 = vshrl.u32 %v395, 7
      %398 = vset.pattern.permute.xlu0 %v396
      %399 = vperm.xlu0 %398, %v394
      %v400 = vpop.permute.xlu0 %399
      %v401 = vperm.slane %v337, 1
      %v402 = vlaneseq
      %v403 = vshrl.u32 %v402, 7
      %405 = vset.pattern.permute.xlu0 %v403
      %406 = vperm.xlu0 %405, %v401
      %v407 = vpop.permute.xlu0 %406
      %v408 = vperm.slane %v337, 2
      %v409 = vlaneseq
      %v410 = vshrl.u32 %v409, 7
      %412 = vset.pattern.permute.xlu0 %v410
      %413 = vperm.xlu0 %412, %v408
      %v414 = vpop.permute.xlu0 %413
      %v415 = vperm.slane %v337, 3
      %v416 = vlaneseq
      %v417 = vshrl.u32 %v416, 7
      %419 = vset.pattern.permute.xlu0 %v417
      %420 = vperm.xlu0 %419, %v415
      %v421 = vpop.permute.xlu0 %420
      %v422 = vperm.slane %v337, 4
      %v423 = vlaneseq
      %v424 = vshrl.u32 %v423, 7
      %426 = vset.pattern.permute.xlu0 %v424
      %427 = vperm.xlu0 %426, %v422
      %v428 = vpop.permute.xlu0 %427
      %v429 = vperm.slane %v337, 5
      %v430 = vlaneseq
      %v431 = vshrl.u32 %v430, 7
      %433 = vset.pattern.permute.xlu0 %v431
      %434 = vperm.xlu0 %433, %v429
      %v435 = vpop.permute.xlu0 %434
      %v436 = vperm.slane %v337, 6
      %v437 = vlaneseq
      %v438 = vshrl.u32 %v437, 7
      %440 = vset.pattern.permute.xlu0 %v438
      %441 = vperm.xlu0 %440, %v436
      %v442 = vpop.permute.xlu0 %441
      %v443 = vperm.slane %v337, 7
      %v444 = vlaneseq
      %v445 = vshrl.u32 %v444, 7
      %447 = vset.pattern.permute.xlu0 %v445
      %448 = vperm.xlu0 %447, %v443
      %v449 = vpop.permute.xlu0 %448
      %vm450 = vcmp.eq.s32.totalorder %v331, %v344
      %vm451 = vcmp.eq.s32.totalorder %v331, %v351
      %vm452 = vcmp.eq.s32.totalorder %v331, %v358
      %vm453 = vcmp.eq.s32.totalorder %v331, %v365
      %vm454 = vcmp.eq.s32.totalorder %v331, %v372
      %vm455 = vcmp.eq.s32.totalorder %v331, %v379
      %vm456 = vcmp.eq.s32.totalorder %v331, %v386
      %vm457 = vcmp.eq.s32.totalorder %v331, %v393
      %vm458 = vcmp.eq.s32.totalorder %v331, %v400
      %vm459 = vcmp.eq.s32.totalorder %v331, %v407
      %vm460 = vcmp.eq.s32.totalorder %v331, %v414
      %vm461 = vcmp.eq.s32.totalorder %v331, %v421
      %vm462 = vcmp.eq.s32.totalorder %v331, %v428
      %vm463 = vcmp.eq.s32.totalorder %v331, %v435
      %vm464 = vcmp.eq.s32.totalorder %v331, %v442
      %vm465 = vcmp.eq.s32.totalorder %v331, %v449
      %v466 = vsel %vm450, 1, 0
      %v467 = vsel %vm451, 1, 0
      %v468 = vsel %vm452, 1, 0
      %v469 = vsel %vm453, 1, 0
      %v470 = vsel %vm454, 1, 0
      %v471 = vsel %vm455, 1, 0
      %v472 = vsel %vm456, 1, 0
      %v473 = vsel %vm457, 1, 0
      %v474 = vsel %vm458, 1, 0
      %v475 = vsel %vm459, 1, 0
      %v476 = vsel %vm460, 1, 0
      %v477 = vsel %vm461, 1, 0
      %v478 = vsel %vm462, 1, 0
      %v479 = vsel %vm463, 1, 0
      %v480 = vsel %vm464, 1, 0
      %v481 = vsel %vm465, 1, 0
      %v482 = vcvt.s32.f32 %v466
      %v483 = vcvt.s32.f32 %v467
      %v484 = vcvt.s32.f32 %v468
      %v485 = vcvt.s32.f32 %v469
      %v486 = vcvt.s32.f32 %v470
      %v487 = vcvt.s32.f32 %v471
      %v488 = vcvt.s32.f32 %v472
      %v489 = vcvt.s32.f32 %v473
      %v490 = vcvt.s32.f32 %v474
      %v491 = vcvt.s32.f32 %v475
      %v492 = vcvt.s32.f32 %v476
      %v493 = vcvt.s32.f32 %v477
      %v494 = vcvt.s32.f32 %v478
      %v495 = vcvt.s32.f32 %v479
      %v496 = vcvt.s32.f32 %v480
      %v497 = vcvt.s32.f32 %v481
      %v498 = vpack.c.bf16 %v482, %v482
      %v499 = vpack.c.bf16 %v483, %v483
      %v500 = vpack.c.bf16 %v484, %v484
      %v501 = vpack.c.bf16 %v485, %v485
      %v502 = vpack.c.bf16 %v486, %v486
      %v503 = vpack.c.bf16 %v487, %v487
      %v504 = vpack.c.bf16 %v488, %v488
      %v505 = vpack.c.bf16 %v489, %v489
      %v506 = vpack.c.bf16 %v490, %v490
      %v507 = vpack.c.bf16 %v491, %v491
      %v508 = vpack.c.bf16 %v492, %v492
      %v509 = vpack.c.bf16 %v493, %v493
      %v510 = vpack.c.bf16 %v494, %v494
      %v511 = vpack.c.bf16 %v495, %v495
      %v512 = vpack.c.bf16 %v496, %v496
      %v513 = vpack.c.bf16 %v497, %v497
      %v530 = vunpack.c.l.b16 %v498
      %v531 = vunpack.c.l.b16 %v499
      %v532 = vunpack.c.l.b16 %v500
      %v533 = vunpack.c.l.b16 %v501
      %v534 = vunpack.c.l.b16 %v502
      %v535 = vunpack.c.l.b16 %v503
      %v536 = vunpack.c.l.b16 %v504
      %v537 = vunpack.c.l.b16 %v505
      %v538 = vunpack.c.l.b16 %v506
      %v539 = vunpack.c.l.b16 %v507
      %v540 = vunpack.c.l.b16 %v508
      %v541 = vunpack.c.l.b16 %v509
      %v542 = vunpack.c.l.b16 %v510
      %v543 = vunpack.c.l.b16 %v511
      %v544 = vunpack.c.l.b16 %v512
      %v545 = vunpack.c.l.b16 %v513
      %v546 = vpack.c.b16 %v531, %v530
      %v547 = vpack.c.b16 %v533, %v532
      %v548 = vpack.c.b16 %v535, %v534
      %v549 = vpack.c.b16 %v537, %v536
      %v550 = vpack.c.b16 %v539, %v538
      %v551 = vpack.c.b16 %v541, %v540
      %v552 = vpack.c.b16 %v543, %v542
      %v553 = vpack.c.b16 %v545, %v544
      %v556 = vunpack.c.l.b16 %v334
      %v557 = vunpack.c.l.b16 %v335
      %v558 = vpack.c.b16 %v557, %v556
      %vm560 = vcmask 130048
      %v562 = vsel %vm560, %v546, 0
      %v565 = vsel %vm560, %v547, 0
      %v568 = vsel %vm560, %v548, 0
      %v571 = vsel %vm560, %v549, 0
      %v574 = vsel %vm560, %v550, 0
      %v577 = vsel %vm560, %v551, 0
      %v580 = vsel %vm560, %v552, 0
      %v583 = vsel %vm560, %v553, 0
      %585 = vmatpush.bf16.msra.mxu0 0
      %586 = vmatpush.bf16.msra.mxu0 0
      %587 = vmatpush.bf16.msra.mxu0 0
      %588 = vmatpush.bf16.msra.mxu0 0
      %589 = vmatpush.bf16.msra.mxu0 0
      %590 = vmatpush.bf16.msra.mxu0 0
      %591 = vmatpush.bf16.msra.mxu0 0
      %592 = vmatpush.bf16.msra.mxu0 %v558
      %593 = vmatmul.bf16.gmra.mxu0 %v562
      %v594 = vpop.f32.mrf.mxu0
      %v595 = vadd.f32 0.0, %v594
      %v596 = vpop.f32.mrf.mxu0
      %v597 = vadd.f32 0.0, %v596
      %598 = vmatmul.bf16.gmra.mxu0 %v565
      %v599 = vpop.f32.mrf.mxu0
      %v600 = vadd.f32 0.0, %v599
      %v601 = vpop.f32.mrf.mxu0
      %v602 = vadd.f32 0.0, %v601
      %603 = vmatmul.bf16.gmra.mxu0 %v568
      %v604 = vpop.f32.mrf.mxu0
      %v605 = vadd.f32 0.0, %v604
      %v606 = vpop.f32.mrf.mxu0
      %v607 = vadd.f32 0.0, %v606
      %608 = vmatmul.bf16.gmra.mxu0 %v571
      %v609 = vpop.f32.mrf.mxu0
      %v610 = vadd.f32 0.0, %v609
      %v611 = vpop.f32.mrf.mxu0
      %v612 = vadd.f32 0.0, %v611
      %613 = vmatmul.bf16.gmra.mxu0 %v574
      %v614 = vpop.f32.mrf.mxu0
      %v615 = vadd.f32 0.0, %v614
      %v616 = vpop.f32.mrf.mxu0
      %v617 = vadd.f32 0.0, %v616
      %618 = vmatmul.bf16.gmra.mxu0 %v577
      %v619 = vpop.f32.mrf.mxu0
      %v620 = vadd.f32 0.0, %v619
      %v621 = vpop.f32.mrf.mxu0
      %v622 = vadd.f32 0.0, %v621
      %623 = vmatmul.bf16.gmra.mxu0 %v580
      %v624 = vpop.f32.mrf.mxu0
      %v625 = vadd.f32 0.0, %v624
      %v626 = vpop.f32.mrf.mxu0
      %v627 = vadd.f32 0.0, %v626
      %628 = vmatmul.bf16.gmra.mxu0 %v583
      %v629 = vpop.f32.mrf.mxu0
      %v630 = vadd.f32 0.0, %v629
      %v631 = vpop.f32.mrf.mxu0
      %v632 = vadd.f32 0.0, %v631
      %633 = vdwg.mxu0
      %v634 = vunpack.c.l.bf16 %v332
      %v635 = vunpack.c.l.bf16 %v333
      %v638 = vrot.slane %v634, 1
      %v639 = vrot.slane %v634, 2
      %v640 = vrot.slane %v634, 3
      %v641 = vrot.slane %v634, 4
      %v642 = vrot.slane %v634, 5
      %v643 = vrot.slane %v634, 6
      %v644 = vrot.slane %v634, 7
      %v645 = vrot.slane %v635, 1
      %v646 = vrot.slane %v635, 2
      %v647 = vrot.slane %v635, 3
      %v648 = vrot.slane %v635, 4
      %v649 = vrot.slane %v635, 5
      %v650 = vrot.slane %v635, 6
      %v651 = vrot.slane %v635, 7
      %v652 = vperm.slane %v634, 0
      %v653 = vperm.slane %v638, 0
      %v654 = vperm.slane %v639, 0
      %v655 = vperm.slane %v640, 0
      %v656 = vperm.slane %v641, 0
      %v657 = vperm.slane %v642, 0
      %v658 = vperm.slane %v643, 0
      %v659 = vperm.slane %v644, 0
      %v660 = vperm.slane %v635, 0
      %v661 = vperm.slane %v645, 0
      %v662 = vperm.slane %v646, 0
      %v663 = vperm.slane %v647, 0
      %v664 = vperm.slane %v648, 0
      %v665 = vperm.slane %v649, 0
      %v666 = vperm.slane %v650, 0
      %v667 = vperm.slane %v651, 0
      %v684 = vmul.f32 %v595, %v652
      %v685 = vmul.f32 %v597, %v653
      %v686 = vmul.f32 %v600, %v654
      %v687 = vmul.f32 %v602, %v655
      %v688 = vmul.f32 %v605, %v656
      %v689 = vmul.f32 %v607, %v657
      %v690 = vmul.f32 %v610, %v658
      %v691 = vmul.f32 %v612, %v659
      %v692 = vmul.f32 %v615, %v660
      %v693 = vmul.f32 %v617, %v661
      %v694 = vmul.f32 %v620, %v662
      %v695 = vmul.f32 %v622, %v663
      %v696 = vmul.f32 %v625, %v664
      %v697 = vmul.f32 %v627, %v665
      %v698 = vmul.f32 %v630, %v666
      %v699 = vmul.f32 %v632, %v667
      %v700 = vsel %vm560, %v684, 0.0
      %701 = vadd.xlane.f32.xlu0 %v700
      %v702 = vpop.xlane.xlu0 %701
      %v703 = vsel %vm560, %v685, 0.0
      %704 = vadd.xlane.f32.xlu0 %v703
      %v705 = vpop.xlane.xlu0 %704
      %v706 = vsel %vm560, %v686, 0.0
      %707 = vadd.xlane.f32.xlu0 %v706
      %v708 = vpop.xlane.xlu0 %707
      %v709 = vsel %vm560, %v687, 0.0
      %710 = vadd.xlane.f32.xlu0 %v709
      %v711 = vpop.xlane.xlu0 %710
      %v712 = vsel %vm560, %v688, 0.0
      %713 = vadd.xlane.f32.xlu0 %v712
      %v714 = vpop.xlane.xlu0 %713
      %v715 = vsel %vm560, %v689, 0.0
      %716 = vadd.xlane.f32.xlu0 %v715
      %v717 = vpop.xlane.xlu0 %716
      %v718 = vsel %vm560, %v690, 0.0
      %719 = vadd.xlane.f32.xlu0 %v718
      %v720 = vpop.xlane.xlu0 %719
      %v721 = vsel %vm560, %v691, 0.0
      %722 = vadd.xlane.f32.xlu0 %v721
      %v723 = vpop.xlane.xlu0 %722
      %v724 = vsel %vm560, %v692, 0.0
      %725 = vadd.xlane.f32.xlu0 %v724
      %v726 = vpop.xlane.xlu0 %725
      %v727 = vsel %vm560, %v693, 0.0
      %728 = vadd.xlane.f32.xlu0 %v727
      %v729 = vpop.xlane.xlu0 %728
      %v730 = vsel %vm560, %v694, 0.0
      %731 = vadd.xlane.f32.xlu0 %v730
      %v732 = vpop.xlane.xlu0 %731
      %v733 = vsel %vm560, %v695, 0.0
      %734 = vadd.xlane.f32.xlu0 %v733
      %v735 = vpop.xlane.xlu0 %734
      %v736 = vsel %vm560, %v696, 0.0
      %737 = vadd.xlane.f32.xlu0 %v736
      %v738 = vpop.xlane.xlu0 %737
      %v739 = vsel %vm560, %v697, 0.0
      %740 = vadd.xlane.f32.xlu0 %v739
      %v741 = vpop.xlane.xlu0 %740
      %v742 = vsel %vm560, %v698, 0.0
      %743 = vadd.xlane.f32.xlu0 %v742
      %v744 = vpop.xlane.xlu0 %743
      %v745 = vsel %vm560, %v699, 0.0
      %746 = vadd.xlane.f32.xlu0 %v745
      %v747 = vpop.xlane.xlu0 %746
      %v748 = vld [vmem:[%s302] sm:$0xff]
      %v749 = vld [vmem:[%s302 + $0x8] sm:$0xff]
      %v766 = vperm.slane %v702, %v331
      %v767 = vperm.slane %v705, %v331
      %v768 = vperm.slane %v708, %v331
      %v769 = vperm.slane %v711, %v331
      %v770 = vperm.slane %v714, %v331
      %v771 = vperm.slane %v717, %v331
      %v772 = vperm.slane %v720, %v331
      %v773 = vperm.slane %v723, %v331
      %v774 = vperm.slane %v726, %v331
      %v775 = vperm.slane %v729, %v331
      %v776 = vperm.slane %v732, %v331
      %v777 = vperm.slane %v735, %v331
      %v778 = vperm.slane %v738, %v331
      %v779 = vperm.slane %v741, %v331
      %v780 = vperm.slane %v744, %v331
      %v781 = vperm.slane %v747, %v331
      %vm782 = vcmask 1041409
      %v783 = vsel %vm782, %v767, %v766
      %vm784 = vcmask 1042434
      %v785 = vsel %vm784, %v768, %v783
      %vm786 = vcmask 1043459
      %v787 = vsel %vm786, %v769, %v785
      %vm788 = vcmask 1044484
      %v789 = vsel %vm788, %v770, %v787
      %vm790 = vcmask 1045509
      %v791 = vsel %vm790, %v771, %v789
      %vm792 = vcmask 1046534
      %v793 = vsel %vm792, %v772, %v791
      %vm794 = vcmask 1047559
      %v795 = vsel %vm794, %v773, %v793
      %v796 = vsel %vm782, %v775, %v774
      %v797 = vsel %vm784, %v776, %v796
      %v798 = vsel %vm786, %v777, %v797
      %v799 = vsel %vm788, %v778, %v798
      %v800 = vsel %vm790, %v779, %v799
      %v801 = vsel %vm792, %v780, %v800
      %v802 = vsel %vm794, %v781, %v801
      %v805 = vmul.f32 %v748, %v795
      %v806 = vmul.f32 %v749, %v802
      %vm807 = vcmask 64512
      %v808 = vsel %vm807, %v805, -inf
      %809 = vmax.xlane.f32.xlu0 %v808
      %v810 = vpop.xlane.xlu0 %809
      %v811 = vsel %vm807, %v806, -inf
      %812 = vmax.xlane.f32.xlu0 %v811
      %v813 = vpop.xlane.xlu0 %812
      %v814 = vsub.f32 %v805, %v810
      %v815 = vsub.f32 %v806, %v813
      %v816 = vmul.f32 %v814, 1.442695
      %v817 = vpow.pop %v816
      %v818 = vmul.f32 %v815, 1.442695
      %v819 = vpow.pop %v818
      %v820 = vsel %vm807, %v817, 0.0
      %821 = vadd.xlane.f32.xlu0 %v820
      %v822 = vpop.xlane.xlu0 %821
      %v823 = vsel %vm807, %v819, 0.0
      %824 = vadd.xlane.f32.xlu0 %v823
      %v825 = vpop.xlane.xlu0 %824
      %v826 = vrcp.pop %v822
      %v827 = vrcp.pop %v825
      %v828 = vmul.f32 %v817, %v826
      %v829 = vmul.f32 %v819, %v827
      %v830 = vperm.slane %v828, 0
      %v831 = vlaneseq
      %v832 = vshrl.u32 %v831, 7
      %834 = vset.pattern.permute.xlu0 %v832
      %835 = vperm.xlu0 %834, %v830
      %v836 = vpop.permute.xlu0 %835
      %v837 = vperm.slane %v828, 1
      %v838 = vlaneseq
      %v839 = vshrl.u32 %v838, 7
      %841 = vset.pattern.permute.xlu0 %v839
      %842 = vperm.xlu0 %841, %v837
      %v843 = vpop.permute.xlu0 %842
      %v844 = vperm.slane %v828, 2
      %v845 = vlaneseq
      %v846 = vshrl.u32 %v845, 7
      %848 = vset.pattern.permute.xlu0 %v846
      %849 = vperm.xlu0 %848, %v844
      %v850 = vpop.permute.xlu0 %849
      %v851 = vperm.slane %v828, 3
      %v852 = vlaneseq
      %v853 = vshrl.u32 %v852, 7
      %855 = vset.pattern.permute.xlu0 %v853
      %856 = vperm.xlu0 %855, %v851
      %v857 = vpop.permute.xlu0 %856
      %v858 = vperm.slane %v828, 4
      %v859 = vlaneseq
      %v860 = vshrl.u32 %v859, 7
      %862 = vset.pattern.permute.xlu0 %v860
      %863 = vperm.xlu0 %862, %v858
      %v864 = vpop.permute.xlu0 %863
      %v865 = vperm.slane %v828, 5
      %v866 = vlaneseq
      %v867 = vshrl.u32 %v866, 7
      %869 = vset.pattern.permute.xlu0 %v867
      %870 = vperm.xlu0 %869, %v865
      %v871 = vpop.permute.xlu0 %870
      %v872 = vperm.slane %v828, 6
      %v873 = vlaneseq
      %v874 = vshrl.u32 %v873, 7
      %876 = vset.pattern.permute.xlu0 %v874
      %877 = vperm.xlu0 %876, %v872
      %v878 = vpop.permute.xlu0 %877
      %v879 = vperm.slane %v828, 7
      %v880 = vlaneseq
      %v881 = vshrl.u32 %v880, 7
      %883 = vset.pattern.permute.xlu0 %v881
      %884 = vperm.xlu0 %883, %v879
      %v885 = vpop.permute.xlu0 %884
      %v886 = vperm.slane %v829, 0
      %v887 = vlaneseq
      %v888 = vshrl.u32 %v887, 7
      %890 = vset.pattern.permute.xlu0 %v888
      %891 = vperm.xlu0 %890, %v886
      %v892 = vpop.permute.xlu0 %891
      %v893 = vperm.slane %v829, 1
      %v894 = vlaneseq
      %v895 = vshrl.u32 %v894, 7
      %897 = vset.pattern.permute.xlu0 %v895
      %898 = vperm.xlu0 %897, %v893
      %v899 = vpop.permute.xlu0 %898
      %v900 = vperm.slane %v829, 2
      %v901 = vlaneseq
      %v902 = vshrl.u32 %v901, 7
      %904 = vset.pattern.permute.xlu0 %v902
      %905 = vperm.xlu0 %904, %v900
      %v906 = vpop.permute.xlu0 %905
      %v907 = vperm.slane %v829, 3
      %v908 = vlaneseq
      %v909 = vshrl.u32 %v908, 7
      %911 = vset.pattern.permute.xlu0 %v909
      %912 = vperm.xlu0 %911, %v907
      %v913 = vpop.permute.xlu0 %912
      %v914 = vperm.slane %v829, 4
      %v915 = vlaneseq
      %v916 = vshrl.u32 %v915, 7
      %918 = vset.pattern.permute.xlu0 %v916
      %919 = vperm.xlu0 %918, %v914
      %v920 = vpop.permute.xlu0 %919
      %v921 = vperm.slane %v829, 5
      %v922 = vlaneseq
      %v923 = vshrl.u32 %v922, 7
      %925 = vset.pattern.permute.xlu0 %v923
      %926 = vperm.xlu0 %925, %v921
      %v927 = vpop.permute.xlu0 %926
      %v928 = vperm.slane %v829, 6
      %v929 = vlaneseq
      %v930 = vshrl.u32 %v929, 7
      %932 = vset.pattern.permute.xlu0 %v930
      %933 = vperm.xlu0 %932, %v928
      %v934 = vpop.permute.xlu0 %933
      %v935 = vperm.slane %v829, 7
      %v936 = vlaneseq
      %v937 = vshrl.u32 %v936, 7
      %939 = vset.pattern.permute.xlu0 %v937
      %940 = vperm.xlu0 %939, %v935
      %v941 = vpop.permute.xlu0 %940
      %v942 = vmul.f32 %v595, %v836
      %v943 = vmul.f32 %v597, %v843
      %v944 = vmul.f32 %v600, %v850
      %v945 = vmul.f32 %v602, %v857
      %v946 = vmul.f32 %v605, %v864
      %v947 = vmul.f32 %v607, %v871
      %v948 = vmul.f32 %v610, %v878
      %v949 = vmul.f32 %v612, %v885
      %v950 = vmul.f32 %v615, %v892
      %v951 = vmul.f32 %v617, %v899
      %v952 = vmul.f32 %v620, %v906
      %v953 = vmul.f32 %v622, %v913
      %v954 = vmul.f32 %v625, %v920
      %v955 = vmul.f32 %v627, %v927
      %v956 = vmul.f32 %v630, %v934
      %v957 = vmul.f32 %v632, %v941
      %vm958 = vcmask 261248
      %v959 = vsel %vm958, %v942, 0.0
      %v960 = vrot.slane %v959, 4
      %v961 = vadd.f32 %v959, %v960
      %v962 = vrot.slane %v961, 2
      %v963 = vadd.f32 %v961, %v962
      %v964 = vrot.slane %v963, 1
      %v965 = vadd.f32 %v963, %v964
      %v966 = vsel %vm958, %v943, 0.0
      %v967 = vrot.slane %v966, 4
      %v968 = vadd.f32 %v966, %v967
      %v969 = vrot.slane %v968, 2
      %v970 = vadd.f32 %v968, %v969
      %v971 = vrot.slane %v970, 1
      %v972 = vadd.f32 %v970, %v971
      %v973 = vsel %vm958, %v944, 0.0
      %v974 = vrot.slane %v973, 4
      %v975 = vadd.f32 %v973, %v974
      %v976 = vrot.slane %v975, 2
      %v977 = vadd.f32 %v975, %v976
      %v978 = vrot.slane %v977, 1
      %v979 = vadd.f32 %v977, %v978
      %v980 = vsel %vm958, %v945, 0.0
      %v981 = vrot.slane %v980, 4
      %v982 = vadd.f32 %v980, %v981
      %v983 = vrot.slane %v982, 2
      %v984 = vadd.f32 %v982, %v983
      %v985 = vrot.slane %v984, 1
      %v986 = vadd.f32 %v984, %v985
      %v987 = vsel %vm958, %v946, 0.0
      %v988 = vrot.slane %v987, 4
      %v989 = vadd.f32 %v987, %v988
      %v990 = vrot.slane %v989, 2
      %v991 = vadd.f32 %v989, %v990
      %v992 = vrot.slane %v991, 1
      %v993 = vadd.f32 %v991, %v992
      %v994 = vsel %vm958, %v947, 0.0
      %v995 = vrot.slane %v994, 4
      %v996 = vadd.f32 %v994, %v995
      %v997 = vrot.slane %v996, 2
      %v998 = vadd.f32 %v996, %v997
      %v999 = vrot.slane %v998, 1
      %v1000 = vadd.f32 %v998, %v999
      %v1001 = vsel %vm958, %v948, 0.0
      %v1002 = vrot.slane %v1001, 4
      %v1003 = vadd.f32 %v1001, %v1002
      %v1004 = vrot.slane %v1003, 2
      %v1005 = vadd.f32 %v1003, %v1004
      %v1006 = vrot.slane %v1005, 1
      %v1007 = vadd.f32 %v1005, %v1006
      %v1008 = vsel %vm958, %v949, 0.0
      %v1009 = vrot.slane %v1008, 4
      %v1010 = vadd.f32 %v1008, %v1009
      %v1011 = vrot.slane %v1010, 2
      %v1012 = vadd.f32 %v1010, %v1011
      %v1013 = vrot.slane %v1012, 1
      %v1014 = vadd.f32 %v1012, %v1013
      %v1015 = vsel %vm958, %v950, 0.0
      %v1016 = vrot.slane %v1015, 4
      %v1017 = vadd.f32 %v1015, %v1016
      %v1018 = vrot.slane %v1017, 2
      %v1019 = vadd.f32 %v1017, %v1018
      %v1020 = vrot.slane %v1019, 1
      %v1021 = vadd.f32 %v1019, %v1020
      %v1022 = vsel %vm958, %v951, 0.0
      %v1023 = vrot.slane %v1022, 4
      %v1024 = vadd.f32 %v1022, %v1023
      %v1025 = vrot.slane %v1024, 2
      %v1026 = vadd.f32 %v1024, %v1025
      %v1027 = vrot.slane %v1026, 1
      %v1028 = vadd.f32 %v1026, %v1027
      %v1029 = vsel %vm958, %v952, 0.0
      %v1030 = vrot.slane %v1029, 4
      %v1031 = vadd.f32 %v1029, %v1030
      %v1032 = vrot.slane %v1031, 2
      %v1033 = vadd.f32 %v1031, %v1032
      %v1034 = vrot.slane %v1033, 1
      %v1035 = vadd.f32 %v1033, %v1034
      %v1036 = vsel %vm958, %v953, 0.0
      %v1037 = vrot.slane %v1036, 4
      %v1038 = vadd.f32 %v1036, %v1037
      %v1039 = vrot.slane %v1038, 2
      %v1040 = vadd.f32 %v1038, %v1039
      %v1041 = vrot.slane %v1040, 1
      %v1042 = vadd.f32 %v1040, %v1041
      %v1043 = vsel %vm958, %v954, 0.0
      %v1044 = vrot.slane %v1043, 4
      %v1045 = vadd.f32 %v1043, %v1044
      %v1046 = vrot.slane %v1045, 2
      %v1047 = vadd.f32 %v1045, %v1046
      %v1048 = vrot.slane %v1047, 1
      %v1049 = vadd.f32 %v1047, %v1048
      %v1050 = vsel %vm958, %v955, 0.0
      %v1051 = vrot.slane %v1050, 4
      %v1052 = vadd.f32 %v1050, %v1051
      %v1053 = vrot.slane %v1052, 2
      %v1054 = vadd.f32 %v1052, %v1053
      %v1055 = vrot.slane %v1054, 1
      %v1056 = vadd.f32 %v1054, %v1055
      %v1057 = vsel %vm958, %v956, 0.0
      %v1058 = vrot.slane %v1057, 4
      %v1059 = vadd.f32 %v1057, %v1058
      %v1060 = vrot.slane %v1059, 2
      %v1061 = vadd.f32 %v1059, %v1060
      %v1062 = vrot.slane %v1061, 1
      %v1063 = vadd.f32 %v1061, %v1062
      %v1064 = vsel %vm958, %v957, 0.0
      %v1065 = vrot.slane %v1064, 4
      %v1066 = vadd.f32 %v1064, %v1065
      %v1067 = vrot.slane %v1066, 2
      %v1068 = vadd.f32 %v1066, %v1067
      %v1069 = vrot.slane %v1068, 1
      %v1070 = vadd.f32 %v1068, %v1069
      %s1071 = scalar_lea.vmem %s292, 16
      %v1072 = vld [vmem:[%s1071] sm:$0xff]
      %v1073 = vld [vmem:[%s1071 + $0x8] sm:$0xff]
      %v1074 = vperm.slane %v1072, 0
      %v1075 = vlaneseq
      %v1076 = vshrl.u32 %v1075, 7
      %1078 = vset.pattern.permute.xlu0 %v1076
      %1079 = vperm.xlu0 %1078, %v1074
      %v1080 = vpop.permute.xlu0 %1079
      %v1081 = vperm.slane %v1072, 1
      %v1082 = vlaneseq
      %v1083 = vshrl.u32 %v1082, 7
      %1085 = vset.pattern.permute.xlu0 %v1083
      %1086 = vperm.xlu0 %1085, %v1081
      %v1087 = vpop.permute.xlu0 %1086
      %v1088 = vperm.slane %v1072, 2
      %v1089 = vlaneseq
      %v1090 = vshrl.u32 %v1089, 7
      %1092 = vset.pattern.permute.xlu0 %v1090
      %1093 = vperm.xlu0 %1092, %v1088
      %v1094 = vpop.permute.xlu0 %1093
      %v1095 = vperm.slane %v1072, 3
      %v1096 = vlaneseq
      %v1097 = vshrl.u32 %v1096, 7
      %1099 = vset.pattern.permute.xlu0 %v1097
      %1100 = vperm.xlu0 %1099, %v1095
      %v1101 = vpop.permute.xlu0 %1100
      %v1102 = vperm.slane %v1072, 4
      %v1103 = vlaneseq
      %v1104 = vshrl.u32 %v1103, 7
      %1106 = vset.pattern.permute.xlu0 %v1104
      %1107 = vperm.xlu0 %1106, %v1102
      %v1108 = vpop.permute.xlu0 %1107
      %v1109 = vperm.slane %v1072, 5
      %v1110 = vlaneseq
      %v1111 = vshrl.u32 %v1110, 7
      %1113 = vset.pattern.permute.xlu0 %v1111
      %1114 = vperm.xlu0 %1113, %v1109
      %v1115 = vpop.permute.xlu0 %1114
      %v1116 = vperm.slane %v1072, 6
      %v1117 = vlaneseq
      %v1118 = vshrl.u32 %v1117, 7
      %1120 = vset.pattern.permute.xlu0 %v1118
      %1121 = vperm.xlu0 %1120, %v1116
      %v1122 = vpop.permute.xlu0 %1121
      %v1123 = vperm.slane %v1072, 7
      %v1124 = vlaneseq
      %v1125 = vshrl.u32 %v1124, 7
      %1127 = vset.pattern.permute.xlu0 %v1125
      %1128 = vperm.xlu0 %1127, %v1123
      %v1129 = vpop.permute.xlu0 %1128
      %v1130 = vperm.slane %v1073, 0
      %v1131 = vlaneseq
      %v1132 = vshrl.u32 %v1131, 7
      %1134 = vset.pattern.permute.xlu0 %v1132
      %1135 = vperm.xlu0 %1134, %v1130
      %v1136 = vpop.permute.xlu0 %1135
      %v1137 = vperm.slane %v1073, 1
      %v1138 = vlaneseq
      %v1139 = vshrl.u32 %v1138, 7
      %1141 = vset.pattern.permute.xlu0 %v1139
      %1142 = vperm.xlu0 %1141, %v1137
      %v1143 = vpop.permute.xlu0 %1142
      %v1144 = vperm.slane %v1073, 2
      %v1145 = vlaneseq
      %v1146 = vshrl.u32 %v1145, 7
      %1148 = vset.pattern.permute.xlu0 %v1146
      %1149 = vperm.xlu0 %1148, %v1144
      %v1150 = vpop.permute.xlu0 %1149
      %v1151 = vperm.slane %v1073, 3
      %v1152 = vlaneseq
      %v1153 = vshrl.u32 %v1152, 7
      %1155 = vset.pattern.permute.xlu0 %v1153
      %1156 = vperm.xlu0 %1155, %v1151
      %v1157 = vpop.permute.xlu0 %1156
      %v1158 = vperm.slane %v1073, 4
      %v1159 = vlaneseq
      %v1160 = vshrl.u32 %v1159, 7
      %1162 = vset.pattern.permute.xlu0 %v1160
      %1163 = vperm.xlu0 %1162, %v1158
      %v1164 = vpop.permute.xlu0 %1163
      %v1165 = vperm.slane %v1073, 5
      %v1166 = vlaneseq
      %v1167 = vshrl.u32 %v1166, 7
      %1169 = vset.pattern.permute.xlu0 %v1167
      %1170 = vperm.xlu0 %1169, %v1165
      %v1171 = vpop.permute.xlu0 %1170
      %v1172 = vperm.slane %v1073, 6
      %v1173 = vlaneseq
      %v1174 = vshrl.u32 %v1173, 7
      %1176 = vset.pattern.permute.xlu0 %v1174
      %1177 = vperm.xlu0 %1176, %v1172
      %v1178 = vpop.permute.xlu0 %1177
      %v1179 = vperm.slane %v1073, 7
      %v1180 = vlaneseq
      %v1181 = vshrl.u32 %v1180, 7
      %1183 = vset.pattern.permute.xlu0 %v1181
      %1184 = vperm.xlu0 %1183, %v1179
      %v1185 = vpop.permute.xlu0 %1184
      %vm1186 = vcmp.eq.s32.totalorder %v331, %v1080
      %vm1187 = vcmp.eq.s32.totalorder %v331, %v1087
      %vm1188 = vcmp.eq.s32.totalorder %v331, %v1094
      %vm1189 = vcmp.eq.s32.totalorder %v331, %v1101
      %vm1190 = vcmp.eq.s32.totalorder %v331, %v1108
      %vm1191 = vcmp.eq.s32.totalorder %v331, %v1115
      %vm1192 = vcmp.eq.s32.totalorder %v331, %v1122
      %vm1193 = vcmp.eq.s32.totalorder %v331, %v1129
      %vm1194 = vcmp.eq.s32.totalorder %v331, %v1136
      %vm1195 = vcmp.eq.s32.totalorder %v331, %v1143
      %vm1196 = vcmp.eq.s32.totalorder %v331, %v1150
      %vm1197 = vcmp.eq.s32.totalorder %v331, %v1157
      %vm1198 = vcmp.eq.s32.totalorder %v331, %v1164
      %vm1199 = vcmp.eq.s32.totalorder %v331, %v1171
      %vm1200 = vcmp.eq.s32.totalorder %v331, %v1178
      %vm1201 = vcmp.eq.s32.totalorder %v331, %v1185
      %v1202 = vsel %vm1186, 1, 0
      %v1203 = vsel %vm1187, 1, 0
      %v1204 = vsel %vm1188, 1, 0
      %v1205 = vsel %vm1189, 1, 0
      %v1206 = vsel %vm1190, 1, 0
      %v1207 = vsel %vm1191, 1, 0
      %v1208 = vsel %vm1192, 1, 0
      %v1209 = vsel %vm1193, 1, 0
      %v1210 = vsel %vm1194, 1, 0
      %v1211 = vsel %vm1195, 1, 0
      %v1212 = vsel %vm1196, 1, 0
      %v1213 = vsel %vm1197, 1, 0
      %v1214 = vsel %vm1198, 1, 0
      %v1215 = vsel %vm1199, 1, 0
      %v1216 = vsel %vm1200, 1, 0
      %v1217 = vsel %vm1201, 1, 0
      %v1218 = vcvt.s32.f32 %v1202
      %v1219 = vcvt.s32.f32 %v1203
      %v1220 = vcvt.s32.f32 %v1204
      %v1221 = vcvt.s32.f32 %v1205
      %v1222 = vcvt.s32.f32 %v1206
      %v1223 = vcvt.s32.f32 %v1207
      %v1224 = vcvt.s32.f32 %v1208
      %v1225 = vcvt.s32.f32 %v1209
      %v1226 = vcvt.s32.f32 %v1210
      %v1227 = vcvt.s32.f32 %v1211
      %v1228 = vcvt.s32.f32 %v1212
      %v1229 = vcvt.s32.f32 %v1213
      %v1230 = vcvt.s32.f32 %v1214
      %v1231 = vcvt.s32.f32 %v1215
      %v1232 = vcvt.s32.f32 %v1216
      %v1233 = vcvt.s32.f32 %v1217
      %v1234 = vpack.c.bf16 %v1218, %v1218
      %v1235 = vpack.c.bf16 %v1219, %v1219
      %v1236 = vpack.c.bf16 %v1220, %v1220
      %v1237 = vpack.c.bf16 %v1221, %v1221
      %v1238 = vpack.c.bf16 %v1222, %v1222
      %v1239 = vpack.c.bf16 %v1223, %v1223
      %v1240 = vpack.c.bf16 %v1224, %v1224
      %v1241 = vpack.c.bf16 %v1225, %v1225
      %v1242 = vpack.c.bf16 %v1226, %v1226
      %v1243 = vpack.c.bf16 %v1227, %v1227
      %v1244 = vpack.c.bf16 %v1228, %v1228
      %v1245 = vpack.c.bf16 %v1229, %v1229
      %v1246 = vpack.c.bf16 %v1230, %v1230
      %v1247 = vpack.c.bf16 %v1231, %v1231
      %v1248 = vpack.c.bf16 %v1232, %v1232
      %v1249 = vpack.c.bf16 %v1233, %v1233
      %v1266 = vunpack.c.l.b16 %v1234
      %v1267 = vunpack.c.l.b16 %v1235
      %v1268 = vunpack.c.l.b16 %v1236
      %v1269 = vunpack.c.l.b16 %v1237
      %v1270 = vunpack.c.l.b16 %v1238
      %v1271 = vunpack.c.l.b16 %v1239
      %v1272 = vunpack.c.l.b16 %v1240
      %v1273 = vunpack.c.l.b16 %v1241
      %v1274 = vunpack.c.l.b16 %v1242
      %v1275 = vunpack.c.l.b16 %v1243
      %v1276 = vunpack.c.l.b16 %v1244
      %v1277 = vunpack.c.l.b16 %v1245
      %v1278 = vunpack.c.l.b16 %v1246
      %v1279 = vunpack.c.l.b16 %v1247
      %v1280 = vunpack.c.l.b16 %v1248
      %v1281 = vunpack.c.l.b16 %v1249
      %v1282 = vpack.c.b16 %v1267, %v1266
      %v1283 = vpack.c.b16 %v1269, %v1268
      %v1284 = vpack.c.b16 %v1271, %v1270
      %v1285 = vpack.c.b16 %v1273, %v1272
      %v1286 = vpack.c.b16 %v1275, %v1274
      %v1287 = vpack.c.b16 %v1277, %v1276
      %v1288 = vpack.c.b16 %v1279, %v1278
      %v1289 = vpack.c.b16 %v1281, %v1280
      %1290 = vrot.lane.b32.xlu0 %v558, 96
      %v1291 = vpop.permute.xlu0 %1290
      %v1294 = vsel %vm560, %v1282, 0
      %v1297 = vsel %vm560, %v1283, 0
      %v1300 = vsel %vm560, %v1284, 0
      %v1303 = vsel %vm560, %v1285, 0
      %v1306 = vsel %vm560, %v1286, 0
      %v1309 = vsel %vm560, %v1287, 0
      %v1312 = vsel %vm560, %v1288, 0
      %v1315 = vsel %vm560, %v1289, 0
      %1317 = vmatpush.bf16.msra.mxu0 0
      %1318 = vmatpush.bf16.msra.mxu0 0
      %1319 = vmatpush.bf16.msra.mxu0 0
      %1320 = vmatpush.bf16.msra.mxu0 0
      %1321 = vmatpush.bf16.msra.mxu0 0
      %1322 = vmatpush.bf16.msra.mxu0 0
      %1323 = vmatpush.bf16.msra.mxu0 0
      %1324 = vmatpush.bf16.msra.mxu0 %v1291
      %1325 = vmatmul.bf16.gmra.mxu0 %v1294
      %v1326 = vpop.f32.mrf.mxu0
      %v1327 = vadd.f32 0.0, %v1326
      %v1328 = vpop.f32.mrf.mxu0
      %v1329 = vadd.f32 0.0, %v1328
      %1330 = vmatmul.bf16.gmra.mxu0 %v1297
      %v1331 = vpop.f32.mrf.mxu0
      %v1332 = vadd.f32 0.0, %v1331
      %v1333 = vpop.f32.mrf.mxu0
      %v1334 = vadd.f32 0.0, %v1333
      %1335 = vmatmul.bf16.gmra.mxu0 %v1300
      %v1336 = vpop.f32.mrf.mxu0
      %v1337 = vadd.f32 0.0, %v1336
      %v1338 = vpop.f32.mrf.mxu0
      %v1339 = vadd.f32 0.0, %v1338
      %1340 = vmatmul.bf16.gmra.mxu0 %v1303
      %v1341 = vpop.f32.mrf.mxu0
      %v1342 = vadd.f32 0.0, %v1341
      %v1343 = vpop.f32.mrf.mxu0
      %v1344 = vadd.f32 0.0, %v1343
      %1345 = vmatmul.bf16.gmra.mxu0 %v1306
      %v1346 = vpop.f32.mrf.mxu0
      %v1347 = vadd.f32 0.0, %v1346
      %v1348 = vpop.f32.mrf.mxu0
      %v1349 = vadd.f32 0.0, %v1348
      %1350 = vmatmul.bf16.gmra.mxu0 %v1309
      %v1351 = vpop.f32.mrf.mxu0
      %v1352 = vadd.f32 0.0, %v1351
      %v1353 = vpop.f32.mrf.mxu0
      %v1354 = vadd.f32 0.0, %v1353
      %1355 = vmatmul.bf16.gmra.mxu0 %v1312
      %v1356 = vpop.f32.mrf.mxu0
      %v1357 = vadd.f32 0.0, %v1356
      %v1358 = vpop.f32.mrf.mxu0
      %v1359 = vadd.f32 0.0, %v1358
      %1360 = vmatmul.bf16.gmra.mxu0 %v1315
      %v1361 = vpop.f32.mrf.mxu0
      %v1362 = vadd.f32 0.0, %v1361
      %v1363 = vpop.f32.mrf.mxu0
      %v1364 = vadd.f32 0.0, %v1363
      %1365 = vdwg.mxu0
      %1366 = vrot.lane.b32.xlu0 %v652, 112
      %v1367 = vpop.permute.xlu0 %1366
      %1368 = vrot.lane.b32.xlu0 %v653, 112
      %v1369 = vpop.permute.xlu0 %1368
      %1370 = vrot.lane.b32.xlu0 %v654, 112
      %v1371 = vpop.permute.xlu0 %1370
      %1372 = vrot.lane.b32.xlu0 %v655, 112
      %v1373 = vpop.permute.xlu0 %1372
      %1374 = vrot.lane.b32.xlu0 %v656, 112
      %v1375 = vpop.permute.xlu0 %1374
      %1376 = vrot.lane.b32.xlu0 %v657, 112
      %v1377 = vpop.permute.xlu0 %1376
      %1378 = vrot.lane.b32.xlu0 %v658, 112
      %v1379 = vpop.permute.xlu0 %1378
      %1380 = vrot.lane.b32.xlu0 %v659, 112
      %v1381 = vpop.permute.xlu0 %1380
      %1382 = vrot.lane.b32.xlu0 %v660, 112
      %v1383 = vpop.permute.xlu0 %1382
      %1384 = vrot.lane.b32.xlu0 %v661, 112
      %v1385 = vpop.permute.xlu0 %1384
      %1386 = vrot.lane.b32.xlu0 %v662, 112
      %v1387 = vpop.permute.xlu0 %1386
      %1388 = vrot.lane.b32.xlu0 %v663, 112
      %v1389 = vpop.permute.xlu0 %1388
      %1390 = vrot.lane.b32.xlu0 %v664, 112
      %v1391 = vpop.permute.xlu0 %1390
      %1392 = vrot.lane.b32.xlu0 %v665, 112
      %v1393 = vpop.permute.xlu0 %1392
      %1394 = vrot.lane.b32.xlu0 %v666, 112
      %v1395 = vpop.permute.xlu0 %1394
      %1396 = vrot.lane.b32.xlu0 %v667, 112
      %v1397 = vpop.permute.xlu0 %1396
      %v1414 = vmul.f32 %v1327, %v1367
      %v1415 = vmul.f32 %v1329, %v1369
      %v1416 = vmul.f32 %v1332, %v1371
      %v1417 = vmul.f32 %v1334, %v1373
      %v1418 = vmul.f32 %v1337, %v1375
      %v1419 = vmul.f32 %v1339, %v1377
      %v1420 = vmul.f32 %v1342, %v1379
      %v1421 = vmul.f32 %v1344, %v1381
      %v1422 = vmul.f32 %v1347, %v1383
      %v1423 = vmul.f32 %v1349, %v1385
      %v1424 = vmul.f32 %v1352, %v1387
      %v1425 = vmul.f32 %v1354, %v1389
      %v1426 = vmul.f32 %v1357, %v1391
      %v1427 = vmul.f32 %v1359, %v1393
      %v1428 = vmul.f32 %v1362, %v1395
      %v1429 = vmul.f32 %v1364, %v1397
      %v1430 = vsel %vm560, %v1414, 0.0
      %1431 = vadd.xlane.f32.xlu0 %v1430
      %v1432 = vpop.xlane.xlu0 %1431
      %v1433 = vsel %vm560, %v1415, 0.0
      %1434 = vadd.xlane.f32.xlu0 %v1433
      %v1435 = vpop.xlane.xlu0 %1434
      %v1436 = vsel %vm560, %v1416, 0.0
      %1437 = vadd.xlane.f32.xlu0 %v1436
      %v1438 = vpop.xlane.xlu0 %1437
      %v1439 = vsel %vm560, %v1417, 0.0
      %1440 = vadd.xlane.f32.xlu0 %v1439
      %v1441 = vpop.xlane.xlu0 %1440
      %v1442 = vsel %vm560, %v1418, 0.0
      %1443 = vadd.xlane.f32.xlu0 %v1442
      %v1444 = vpop.xlane.xlu0 %1443
      %v1445 = vsel %vm560, %v1419, 0.0
      %1446 = vadd.xlane.f32.xlu0 %v1445
      %v1447 = vpop.xlane.xlu0 %1446
      %v1448 = vsel %vm560, %v1420, 0.0
      %1449 = vadd.xlane.f32.xlu0 %v1448
      %v1450 = vpop.xlane.xlu0 %1449
      %v1451 = vsel %vm560, %v1421, 0.0
      %1452 = vadd.xlane.f32.xlu0 %v1451
      %v1453 = vpop.xlane.xlu0 %1452
      %v1454 = vsel %vm560, %v1422, 0.0
      %1455 = vadd.xlane.f32.xlu0 %v1454
      %v1456 = vpop.xlane.xlu0 %1455
      %v1457 = vsel %vm560, %v1423, 0.0
      %1458 = vadd.xlane.f32.xlu0 %v1457
      %v1459 = vpop.xlane.xlu0 %1458
      %v1460 = vsel %vm560, %v1424, 0.0
      %1461 = vadd.xlane.f32.xlu0 %v1460
      %v1462 = vpop.xlane.xlu0 %1461
      %v1463 = vsel %vm560, %v1425, 0.0
      %1464 = vadd.xlane.f32.xlu0 %v1463
      %v1465 = vpop.xlane.xlu0 %1464
      %v1466 = vsel %vm560, %v1426, 0.0
      %1467 = vadd.xlane.f32.xlu0 %v1466
      %v1468 = vpop.xlane.xlu0 %1467
      %v1469 = vsel %vm560, %v1427, 0.0
      %1470 = vadd.xlane.f32.xlu0 %v1469
      %v1471 = vpop.xlane.xlu0 %1470
      %v1472 = vsel %vm560, %v1428, 0.0
      %1473 = vadd.xlane.f32.xlu0 %v1472
      %v1474 = vpop.xlane.xlu0 %1473
      %v1475 = vsel %vm560, %v1429, 0.0
      %1476 = vadd.xlane.f32.xlu0 %v1475
      %v1477 = vpop.xlane.xlu0 %1476
      %s1478 = scalar_lea.vmem %s302, 16
      %v1479 = vld [vmem:[%s1478] sm:$0xff]
      %v1480 = vld [vmem:[%s1478 + $0x8] sm:$0xff]
      %v1497 = vperm.slane %v1432, %v331
      %v1498 = vperm.slane %v1435, %v331
      %v1499 = vperm.slane %v1438, %v331
      %v1500 = vperm.slane %v1441, %v331
      %v1501 = vperm.slane %v1444, %v331
      %v1502 = vperm.slane %v1447, %v331
      %v1503 = vperm.slane %v1450, %v331
      %v1504 = vperm.slane %v1453, %v331
      %v1505 = vperm.slane %v1456, %v331
      %v1506 = vperm.slane %v1459, %v331
      %v1507 = vperm.slane %v1462, %v331
      %v1508 = vperm.slane %v1465, %v331
      %v1509 = vperm.slane %v1468, %v331
      %v1510 = vperm.slane %v1471, %v331
      %v1511 = vperm.slane %v1474, %v331
      %v1512 = vperm.slane %v1477, %v331
      %v1513 = vsel %vm782, %v1498, %v1497
      %v1514 = vsel %vm784, %v1499, %v1513
      %v1515 = vsel %vm786, %v1500, %v1514
      %v1516 = vsel %vm788, %v1501, %v1515
      %v1517 = vsel %vm790, %v1502, %v1516
      %v1518 = vsel %vm792, %v1503, %v1517
      %v1519 = vsel %vm794, %v1504, %v1518
      %v1520 = vsel %vm782, %v1506, %v1505
      %v1521 = vsel %vm784, %v1507, %v1520
      %v1522 = vsel %vm786, %v1508, %v1521
      %v1523 = vsel %vm788, %v1509, %v1522
      %v1524 = vsel %vm790, %v1510, %v1523
      %v1525 = vsel %vm792, %v1511, %v1524
      %v1526 = vsel %vm794, %v1512, %v1525
      %v1529 = vmul.f32 %v1479, %v1519
      %v1530 = vmul.f32 %v1480, %v1526
      %v1531 = vsel %vm807, %v1529, -inf
      %1532 = vmax.xlane.f32.xlu0 %v1531
      %v1533 = vpop.xlane.xlu0 %1532
      %v1534 = vsel %vm807, %v1530, -inf
      %1535 = vmax.xlane.f32.xlu0 %v1534
      %v1536 = vpop.xlane.xlu0 %1535
      %v1537 = vsub.f32 %v1529, %v1533
      %v1538 = vsub.f32 %v1530, %v1536
      %v1539 = vmul.f32 %v1537, 1.442695
      %v1540 = vpow.pop %v1539
      %v1541 = vmul.f32 %v1538, 1.442695
      %v1542 = vpow.pop %v1541
      %v1543 = vsel %vm807, %v1540, 0.0
      %1544 = vadd.xlane.f32.xlu0 %v1543
      %v1545 = vpop.xlane.xlu0 %1544
      %v1546 = vsel %vm807, %v1542, 0.0
      %1547 = vadd.xlane.f32.xlu0 %v1546
      %v1548 = vpop.xlane.xlu0 %1547
      %v1549 = vrcp.pop %v1545
      %v1550 = vrcp.pop %v1548
      %v1551 = vmul.f32 %v1540, %v1549
      %v1552 = vmul.f32 %v1542, %v1550
      %v1553 = vperm.slane %v1551, 0
      %v1554 = vlaneseq
      %v1555 = vshrl.u32 %v1554, 7
      %1557 = vset.pattern.permute.xlu0 %v1555
      %1558 = vperm.xlu0 %1557, %v1553
      %v1559 = vpop.permute.xlu0 %1558
      %v1560 = vperm.slane %v1551, 1
      %v1561 = vlaneseq
      %v1562 = vshrl.u32 %v1561, 7
      %1564 = vset.pattern.permute.xlu0 %v1562
      %1565 = vperm.xlu0 %1564, %v1560
      %v1566 = vpop.permute.xlu0 %1565
      %v1567 = vperm.slane %v1551, 2
      %v1568 = vlaneseq
      %v1569 = vshrl.u32 %v1568, 7
      %1571 = vset.pattern.permute.xlu0 %v1569
      %1572 = vperm.xlu0 %1571, %v1567
      %v1573 = vpop.permute.xlu0 %1572
      %v1574 = vperm.slane %v1551, 3
      %v1575 = vlaneseq
      %v1576 = vshrl.u32 %v1575, 7
      %1578 = vset.pattern.permute.xlu0 %v1576
      %1579 = vperm.xlu0 %1578, %v1574
      %v1580 = vpop.permute.xlu0 %1579
      %v1581 = vperm.slane %v1551, 4
      %v1582 = vlaneseq
      %v1583 = vshrl.u32 %v1582, 7
      %1585 = vset.pattern.permute.xlu0 %v1583
      %1586 = vperm.xlu0 %1585, %v1581
      %v1587 = vpop.permute.xlu0 %1586
      %v1588 = vperm.slane %v1551, 5
      %v1589 = vlaneseq
      %v1590 = vshrl.u32 %v1589, 7
      %1592 = vset.pattern.permute.xlu0 %v1590
      %1593 = vperm.xlu0 %1592, %v1588
      %v1594 = vpop.permute.xlu0 %1593
      %v1595 = vperm.slane %v1551, 6
      %v1596 = vlaneseq
      %v1597 = vshrl.u32 %v1596, 7
      %1599 = vset.pattern.permute.xlu0 %v1597
      %1600 = vperm.xlu0 %1599, %v1595
      %v1601 = vpop.permute.xlu0 %1600
      %v1602 = vperm.slane %v1551, 7
      %v1603 = vlaneseq
      %v1604 = vshrl.u32 %v1603, 7
      %1606 = vset.pattern.permute.xlu0 %v1604
      %1607 = vperm.xlu0 %1606, %v1602
      %v1608 = vpop.permute.xlu0 %1607
      %v1609 = vperm.slane %v1552, 0
      %v1610 = vlaneseq
      %v1611 = vshrl.u32 %v1610, 7
      %1613 = vset.pattern.permute.xlu0 %v1611
      %1614 = vperm.xlu0 %1613, %v1609
      %v1615 = vpop.permute.xlu0 %1614
      %v1616 = vperm.slane %v1552, 1
      %v1617 = vlaneseq
      %v1618 = vshrl.u32 %v1617, 7
      %1620 = vset.pattern.permute.xlu0 %v1618
      %1621 = vperm.xlu0 %1620, %v1616
      %v1622 = vpop.permute.xlu0 %1621
      %v1623 = vperm.slane %v1552, 2
      %v1624 = vlaneseq
      %v1625 = vshrl.u32 %v1624, 7
      %1627 = vset.pattern.permute.xlu0 %v1625
      %1628 = vperm.xlu0 %1627, %v1623
      %v1629 = vpop.permute.xlu0 %1628
      %v1630 = vperm.slane %v1552, 3
      %v1631 = vlaneseq
      %v1632 = vshrl.u32 %v1631, 7
      %1634 = vset.pattern.permute.xlu0 %v1632
      %1635 = vperm.xlu0 %1634, %v1630
      %v1636 = vpop.permute.xlu0 %1635
      %v1637 = vperm.slane %v1552, 4
      %v1638 = vlaneseq
      %v1639 = vshrl.u32 %v1638, 7
      %1641 = vset.pattern.permute.xlu0 %v1639
      %1642 = vperm.xlu0 %1641, %v1637
      %v1643 = vpop.permute.xlu0 %1642
      %v1644 = vperm.slane %v1552, 5
      %v1645 = vlaneseq
      %v1646 = vshrl.u32 %v1645, 7
      %1648 = vset.pattern.permute.xlu0 %v1646
      %1649 = vperm.xlu0 %1648, %v1644
      %v1650 = vpop.permute.xlu0 %1649
      %v1651 = vperm.slane %v1552, 6
      %v1652 = vlaneseq
      %v1653 = vshrl.u32 %v1652, 7
      %1655 = vset.pattern.permute.xlu0 %v1653
      %1656 = vperm.xlu0 %1655, %v1651
      %v1657 = vpop.permute.xlu0 %1656
      %v1658 = vperm.slane %v1552, 7
      %v1659 = vlaneseq
      %v1660 = vshrl.u32 %v1659, 7
      %1662 = vset.pattern.permute.xlu0 %v1660
      %1663 = vperm.xlu0 %1662, %v1658
      %v1664 = vpop.permute.xlu0 %1663
      %v1665 = vmul.f32 %v1327, %v1559
      %v1666 = vmul.f32 %v1329, %v1566
      %v1667 = vmul.f32 %v1332, %v1573
      %v1668 = vmul.f32 %v1334, %v1580
      %v1669 = vmul.f32 %v1337, %v1587
      %v1670 = vmul.f32 %v1339, %v1594
      %v1671 = vmul.f32 %v1342, %v1601
      %v1672 = vmul.f32 %v1344, %v1608
      %v1673 = vmul.f32 %v1347, %v1615
      %v1674 = vmul.f32 %v1349, %v1622
      %v1675 = vmul.f32 %v1352, %v1629
      %v1676 = vmul.f32 %v1354, %v1636
      %v1677 = vmul.f32 %v1357, %v1643
      %v1678 = vmul.f32 %v1359, %v1650
      %v1679 = vmul.f32 %v1362, %v1657
      %v1680 = vmul.f32 %v1364, %v1664
      %v1681 = vsel %vm958, %v1665, 0.0
      %v1682 = vrot.slane %v1681, 4
      %v1683 = vadd.f32 %v1681, %v1682
      %v1684 = vrot.slane %v1683, 2
      %v1685 = vadd.f32 %v1683, %v1684
      %v1686 = vrot.slane %v1685, 1
      %v1687 = vadd.f32 %v1685, %v1686
      %v1688 = vsel %vm958, %v1666, 0.0
      %v1689 = vrot.slane %v1688, 4
      %v1690 = vadd.f32 %v1688, %v1689
      %v1691 = vrot.slane %v1690, 2
      %v1692 = vadd.f32 %v1690, %v1691
      %v1693 = vrot.slane %v1692, 1
      %v1694 = vadd.f32 %v1692, %v1693
      %v1695 = vsel %vm958, %v1667, 0.0
      %v1696 = vrot.slane %v1695, 4
      %v1697 = vadd.f32 %v1695, %v1696
      %v1698 = vrot.slane %v1697, 2
      %v1699 = vadd.f32 %v1697, %v1698
      %v1700 = vrot.slane %v1699, 1
      %v1701 = vadd.f32 %v1699, %v1700
      %v1702 = vsel %vm958, %v1668, 0.0
      %v1703 = vrot.slane %v1702, 4
      %v1704 = vadd.f32 %v1702, %v1703
      %v1705 = vrot.slane %v1704, 2
      %v1706 = vadd.f32 %v1704, %v1705
      %v1707 = vrot.slane %v1706, 1
      %v1708 = vadd.f32 %v1706, %v1707
      %v1709 = vsel %vm958, %v1669, 0.0
      %v1710 = vrot.slane %v1709, 4
      %v1711 = vadd.f32 %v1709, %v1710
      %v1712 = vrot.slane %v1711, 2
      %v1713 = vadd.f32 %v1711, %v1712
      %v1714 = vrot.slane %v1713, 1
      %v1715 = vadd.f32 %v1713, %v1714
      %v1716 = vsel %vm958, %v1670, 0.0
      %v1717 = vrot.slane %v1716, 4
      %v1718 = vadd.f32 %v1716, %v1717
      %v1719 = vrot.slane %v1718, 2
      %v1720 = vadd.f32 %v1718, %v1719
      %v1721 = vrot.slane %v1720, 1
      %v1722 = vadd.f32 %v1720, %v1721
      %v1723 = vsel %vm958, %v1671, 0.0
      %v1724 = vrot.slane %v1723, 4
      %v1725 = vadd.f32 %v1723, %v1724
      %v1726 = vrot.slane %v1725, 2
      %v1727 = vadd.f32 %v1725, %v1726
      %v1728 = vrot.slane %v1727, 1
      %v1729 = vadd.f32 %v1727, %v1728
      %v1730 = vsel %vm958, %v1672, 0.0
      %v1731 = vrot.slane %v1730, 4
      %v1732 = vadd.f32 %v1730, %v1731
      %v1733 = vrot.slane %v1732, 2
      %v1734 = vadd.f32 %v1732, %v1733
      %v1735 = vrot.slane %v1734, 1
      %v1736 = vadd.f32 %v1734, %v1735
      %v1737 = vsel %vm958, %v1673, 0.0
      %v1738 = vrot.slane %v1737, 4
      %v1739 = vadd.f32 %v1737, %v1738
      %v1740 = vrot.slane %v1739, 2
      %v1741 = vadd.f32 %v1739, %v1740
      %v1742 = vrot.slane %v1741, 1
      %v1743 = vadd.f32 %v1741, %v1742
      %v1744 = vsel %vm958, %v1674, 0.0
      %v1745 = vrot.slane %v1744, 4
      %v1746 = vadd.f32 %v1744, %v1745
      %v1747 = vrot.slane %v1746, 2
      %v1748 = vadd.f32 %v1746, %v1747
      %v1749 = vrot.slane %v1748, 1
      %v1750 = vadd.f32 %v1748, %v1749
      %v1751 = vsel %vm958, %v1675, 0.0
      %v1752 = vrot.slane %v1751, 4
      %v1753 = vadd.f32 %v1751, %v1752
      %v1754 = vrot.slane %v1753, 2
      %v1755 = vadd.f32 %v1753, %v1754
      %v1756 = vrot.slane %v1755, 1
      %v1757 = vadd.f32 %v1755, %v1756
      %v1758 = vsel %vm958, %v1676, 0.0
      %v1759 = vrot.slane %v1758, 4
      %v1760 = vadd.f32 %v1758, %v1759
      %v1761 = vrot.slane %v1760, 2
      %v1762 = vadd.f32 %v1760, %v1761
      %v1763 = vrot.slane %v1762, 1
      %v1764 = vadd.f32 %v1762, %v1763
      %v1765 = vsel %vm958, %v1677, 0.0
      %v1766 = vrot.slane %v1765, 4
      %v1767 = vadd.f32 %v1765, %v1766
      %v1768 = vrot.slane %v1767, 2
      %v1769 = vadd.f32 %v1767, %v1768
      %v1770 = vrot.slane %v1769, 1
      %v1771 = vadd.f32 %v1769, %v1770
      %v1772 = vsel %vm958, %v1678, 0.0
      %v1773 = vrot.slane %v1772, 4
      %v1774 = vadd.f32 %v1772, %v1773
      %v1775 = vrot.slane %v1774, 2
      %v1776 = vadd.f32 %v1774, %v1775
      %v1777 = vrot.slane %v1776, 1
      %v1778 = vadd.f32 %v1776, %v1777
      %v1779 = vsel %vm958, %v1679, 0.0
      %v1780 = vrot.slane %v1779, 4
      %v1781 = vadd.f32 %v1779, %v1780
      %v1782 = vrot.slane %v1781, 2
      %v1783 = vadd.f32 %v1781, %v1782
      %v1784 = vrot.slane %v1783, 1
      %v1785 = vadd.f32 %v1783, %v1784
      %v1786 = vsel %vm958, %v1680, 0.0
      %v1787 = vrot.slane %v1786, 4
      %v1788 = vadd.f32 %v1786, %v1787
      %v1789 = vrot.slane %v1788, 2
      %v1790 = vadd.f32 %v1788, %v1789
      %v1791 = vrot.slane %v1790, 1
      %v1792 = vadd.f32 %v1790, %v1791
      %v1809 = vsel %vm782, %v972, %v965
      %v1810 = vsel %vm784, %v979, %v1809
      %v1811 = vsel %vm786, %v986, %v1810
      %v1812 = vsel %vm788, %v993, %v1811
      %v1813 = vsel %vm790, %v1000, %v1812
      %v1814 = vsel %vm792, %v1007, %v1813
      %v1815 = vsel %vm794, %v1014, %v1814
      %v1816 = vsel %vm782, %v1028, %v1021
      %v1817 = vsel %vm784, %v1035, %v1816
      %v1818 = vsel %vm786, %v1042, %v1817
      %v1819 = vsel %vm788, %v1049, %v1818
      %v1820 = vsel %vm790, %v1056, %v1819
      %v1821 = vsel %vm792, %v1063, %v1820
      %v1822 = vsel %vm794, %v1070, %v1821
      %1823 = vrot.lane.b32.xlu0 %v1815, 112
      %v1824 = vpop.permute.xlu0 %1823
      %1825 = vrot.lane.b32.xlu0 %v1822, 112
      %v1826 = vpop.permute.xlu0 %1825
      %v1845 = vsel %vm782, %v1694, %v1687
      %v1846 = vsel %vm784, %v1701, %v1845
      %v1847 = vsel %vm786, %v1708, %v1846
      %v1848 = vsel %vm788, %v1715, %v1847
      %v1849 = vsel %vm790, %v1722, %v1848
      %v1850 = vsel %vm792, %v1729, %v1849
      %v1851 = vsel %vm794, %v1736, %v1850
      %v1852 = vsel %vm782, %v1750, %v1743
      %v1853 = vsel %vm784, %v1757, %v1852
      %v1854 = vsel %vm786, %v1764, %v1853
      %v1855 = vsel %vm788, %v1771, %v1854
      %v1856 = vsel %vm790, %v1778, %v1855
      %v1857 = vsel %vm792, %v1785, %v1856
      %v1858 = vsel %vm794, %v1792, %v1857
      %v1861 = vsel %vm560, %v1824, %v1851
      %v1862 = vsel %vm560, %v1826, %v1858
      %v1863 = vpack.c.bf16 %v1861, %v1861
      %v1864 = vpack.c.bf16 %v1862, %v1862
      %vm1865 = vcmask 257024
      %1866 = vst.msk [vmem:[%s327] sm:$0xf] %vm1865, %v1863
      %1867 = vst.msk [vmem:[%s327 + $0x4] sm:$0xf] %vm1865, %v1864
      %s1868 = smul.u32 2, %s20
      %p1869 = scmp.lt.s32.totalorder %s19, 1
      %s1870 = scalar_select %p1869, %s19, 1
      %p1871 = scmp.lt.s32.totalorder %s1868, 1
      %s1872 = scalar_select %p1871, %s1868, 1
      %s1873 = smul.addr %s1870, 2
      %s1874 = sadd.s32 %s1872, %s1873
      %s1875 = smul.addr %s1874, 4
      %s1876 = scalar_lea.vmem %s4, %s1875
      // Predicated region
      $region37: #{sparse_attention_forward.4} parent=35 // pred_check
        %p1877 = pneg %p157
      $region38: #{sparse_attention_forward.4} parent=35 // pred_check_branch
        %1879 = sbr.rel (%p1877) target = $region40
      $region39: #{sparse_attention_forward.4} parent=35 // pred_region
        %s1880 = smul.u32 2, %s20
      $region40: #{sparse_attention_forward.4} parent=35 // pred_fallthru
        _
    $region36: #{sparse_attention_forward.4} parent=5 // pred_fallthru
      _
    %p1881 = scmp.le.s32.totalorder 2, %s10
    // Predicated region
    $region41: #{sparse_attention_forward.4} parent=5 // pred_check
      %p1882 = pneg %p1881
    $region42: #{sparse_attention_forward.4} parent=5 // pred_check_branch
      %1884 = sbr.rel (%p1882) target = $region44
    $region43: #{sparse_attention_forward.4} parent=5 // pred_region
      %s1885 = ssub.s32 %s10, 2
      // Predicated region
      $region45: #{sparse_attention_forward.4} parent=43 // pred_check
        %p1886 = pneg %p163
      $region46: #{sparse_attention_forward.4} parent=43 // pred_check_branch
        %1888 = sbr.rel (%p1886) target = $region48
      $region47: #{sparse_attention_forward.4} parent=43 // pred_region
        %s1889 = smul.u32 2, %s22
        %p1890 = scmp.lt.s32.totalorder %s21, 1
        %s1891 = scalar_select %p1890, %s21, 1
        %p1892 = scmp.lt.s32.totalorder %s1889, 1
        %s1893 = scalar_select %p1892, %s1889, 1
        %s1894 = smul.addr %s1891, 2
        %s1895 = sadd.s32 %s1893, %s1894
        %s1896 = smul.addr %s1895, 4
        %s1897 = scalar_lea.vmem %s4, %s1896
      $region48: #{sparse_attention_forward.4} parent=43 // pred_fallthru
        _
    $region44: #{sparse_attention_forward.4} parent=5 // pred_fallthru
      _
  $region6: #{sparse_attention_forward.4} parent=0 // loop_footer
    %s14 = sadd.s32 1, %s10
  $region7: #{sparse_attention_forward.4} parent=0 // loop_footer_branch
    %9 = sbr.rel target = $region3
  $region8: #{sparse_attention_forward.4} parent=0 // loop_exit
    _

</llo_original>
